<compile_context>
chip_gen: v7x
topology: tpu7x:2x2x1
jax: 0.10.0
libtpu: 0.0.40
codegen_flags: <defaults>
</compile_context>

<pallas_src>
import jax
import jax.numpy as jnp
from jax import lax
from jax.experimental import pallas as pl
from jax.experimental.pallas import tpu as pltpu

LANE = 128          # TPU lane width; every layer dim is zero-padded to this.
PROB_LANE = 127     # spare lane of the output slab that carries the discriminator prob
NUM_LAYERS = 9      # 3 encoder + 1 composed(enc3.dec0) + 1 decoder + 4 discriminator


def _num_tensorcores():
    try:
        return max(1, int(getattr(jax.devices()[0], "num_cores", 1) or 1))
    except Exception:
        return 1


def _bf16_relu_ok():
    # bf16 VALU exists on v6e / v7x; keep f32 ReLU elsewhere (v5e has no bf16 VPU).
    try:
        kind = jax.devices()[0].device_kind.lower()
        return ("v6" in kind) or ("v7" in kind)
    except Exception:
        return False


def _auto_batch_tile(batch, max_tile=2048):
    """Big single tile on 1-TC chips; even grid across TCs on multi-TC chips."""
    steps = _num_tensorcores()
    bt = -(-batch // steps)                  # ceil
    bt = min(bt, max_tile)
    bt = max(16, -(-bt // 16) * 16)          # bf16 min sublane tile is 16
    return bt


def make_alad_kernel(input_dim, relu_bf16):
    """Build the fused ALAD kernel for a fixed (static) input feature width."""
    cd = jnp.bfloat16
    D = input_dim

    def kernel(x_ref, w_ref, b_ref, out_ref):
        # x_ref   : (bt, D)         f32  raw input features
        # w_ref   : (9, 128, 128)   bf16 zero-padded weight stack, stored (in, out)
        # b_ref   : (9, 1, 128)     f32  zero-padded bias stack
        # out_ref : (bt, 128)       f32  lanes [0, D) = x_hat, lane 127 = prob

        def lin(h, i):
            # bf16 x bf16 MXU matmul, f32 accumulation, f32 bias add.
            return jnp.dot(h, w_ref[i], preferred_element_type=jnp.float32) + b_ref[i]

        def act(v):
            # ReLU commutes exactly with the bf16 cast; bf16 max halves vreg count.
            if relu_bf16:
                return jnp.maximum(v.astype(cd), 0.0)
            return jnp.maximum(v, 0.0).astype(cd)

        # ---- encoder layer 0: in-kernel bf16 cast, K=D matmul (padded rows are 0) ----
        x0 = x_ref[...].astype(cd)                                   # (bt, D)
        h = act(jnp.dot(x0, w_ref[0][:D, :],
                        preferred_element_type=jnp.float32) + b_ref[0])

        # ---- encoder layers 1,2 + composed enc3∘dec0 (all followed by ReLU) ----
        for i in (1, 2, 3):
            h = act(lin(h, i))

        # ---- decoder output layer (no activation) -> x_hat; lanes >= D are zero ----
        x_hat = lin(h, 4)                                            # (bt, 128) f32

        # ---- discriminator: (Linear + ReLU) x3, Linear, Sigmoid ----
        h = x_hat.astype(cd)
        for i in (5, 6, 7):
            h = act(lin(h, i))
        logits = lin(h, 8)                       # real logit sits in lane PROB_LANE
        prob = pl.reciprocal(1.0 + jnp.exp(-logits), approx=True)    # EUP exp + vrcp

        lane = lax.broadcasted_iota(jnp.int32, out_ref.shape, 1)
        out_ref[...] = jnp.where(lane == PROB_LANE, prob, x_hat).astype(out_ref.dtype)

    return kernel


def pack_params(layers, compute_dtype=jnp.bfloat16):
    """Pack the 10 (w, b) module params into 9 fused, zero-padded stacks.

    * Encoder layer 3 and decoder layer 0 have no nonlinearity between them, so they
      are composed exactly in f32 (W34 = W3 @ W4, b34 = b3 @ W4 + b4) before the bf16
      cast.
    * The final discriminator layer is packed into column PROB_LANE so its sigmoid
      output lands directly in the spare lane of the fused output slab.
    * w is stored (in, out), i.e. transposed vs. nn.Linear.weight.
    """
    assert len(layers) == 10
    w3, b3 = layers[3]
    w4, b4 = layers[4]
    w34 = w3.astype(jnp.float32) @ w4.astype(jnp.float32)
    b34 = b3.astype(jnp.float32) @ w4.astype(jnp.float32) + b4.astype(jnp.float32)
    fused = [layers[0], layers[1], layers[2], (w34, b34), layers[5],
             layers[6], layers[7], layers[8], layers[9]]

    w_stack = jnp.zeros((NUM_LAYERS, LANE, LANE), compute_dtype)
    b_stack = jnp.zeros((NUM_LAYERS, 1, LANE), jnp.float32)
    for i, (w, b) in enumerate(fused):
        fan_in, fan_out = w.shape
        # TODO(synk): add K/N tiling if any layer dim ever exceeds 128.
        assert fan_in <= LANE and fan_out <= LANE
        col0 = PROB_LANE if i == NUM_LAYERS - 1 else 0
        assert col0 + fan_out <= LANE
        w_stack = w_stack.at[i, :fan_in, col0:col0 + fan_out].set(w.astype(compute_dtype))
        b_stack = b_stack.at[i, 0, col0:col0 + fan_out].set(b.astype(jnp.float32))
    return w_stack, b_stack


def alad_forward(x, layers, *, batch_tile=None, compute_dtype=jnp.bfloat16):
    """x: (B, input_dim) f32.  Returns (x_hat (B, input_dim) f32, prob (B, 1) f32)."""
    B, D = x.shape
    assert D <= PROB_LANE, "input_dim must be <= 127 so prob can use the spare lane"

    bt = batch_tile if batch_tile is not None else _auto_batch_tile(B)
    assert bt % 16 == 0, "batch tile must be a multiple of 16 (bf16 sublane tile)"
    grid = (pl.cdiv(B, bt),)

    w_stack, b_stack = pack_params(layers, compute_dtype)
    kernel = make_alad_kernel(D, _bf16_relu_ok())

    out = pl.pallas_call(
        kernel,
        out_shape=jax.ShapeDtypeStruct((B, LANE), jnp.float32),
        grid_spec=pltpu.PrefetchScalarGridSpec(
            num_scalar_prefetch=0,
            grid=grid,
            in_specs=[
                pl.BlockSpec((bt, D), lambda i: (i, 0)),                    # raw input
                pl.BlockSpec((NUM_LAYERS, LANE, LANE), lambda i: (0, 0, 0)),  # weights
                pl.BlockSpec((NUM_LAYERS, 1, LANE), lambda i: (0, 0, 0)),     # biases
            ],
            out_specs=pl.BlockSpec((bt, LANE), lambda i: (i, 0)),
        ),
        compiler_params=pltpu.CompilerParams(
            dimension_semantics=("parallel",),
        ),
    )(x, w_stack, b_stack)

    return out[:, :D], out[:, PROB_LANE:PROB_LANE + 1]


def init_alad_params(key, input_dim, latent_dim):
    """nn.Linear default init U(-1/sqrt(fan_in), 1/sqrt(fan_in)); w stored (in, out)."""
    dims = [(input_dim, 20), (20, 16), (16, 8), (8, latent_dim),   # encoder
            (latent_dim, 16), (16, input_dim),                     # decoder
            (input_dim, 20), (20, 16), (16, 8), (8, 1)]            # discriminator
    layers = []
    for fan_in, fan_out in dims:
        key, kw, kb = jax.random.split(key, 3)
        bound = 1.0 / float(fan_in) ** 0.5
        w = jax.random.uniform(kw, (fan_in, fan_out), jnp.float32, -bound, bound)
        b = jax.random.uniform(kb, (fan_out,), jnp.float32, -bound, bound)
        layers.append((w, b))
    return layers


def reference_forward(x, layers):
    """Pure-f32 JAX reference of the original 10-layer ALAD module."""
    def lin(h, i):
        w, b = layers[i]
        return jnp.dot(h, w) + b

    h = x
    for i in range(3):
        h = jnp.maximum(lin(h, i), 0.0)
    z = lin(h, 3)
    h = jnp.maximum(lin(z, 4), 0.0)
    x_hat = lin(h, 5)
    h = x_hat
    for i in range(6, 9):
        h = jnp.maximum(lin(h, i), 0.0)
    prob = 1.0 / (1.0 + jnp.exp(-lin(h, 9)))
    return x_hat, prob


if __name__ == "__main__":
    key = jax.random.PRNGKey(0)
    input_dim = 64
    latent_dim = 8
    batch = 128

    key, kx, kp = jax.random.split(key, 3)
    x = jax.random.normal(kx, (batch, input_dim), dtype=jnp.float32)
    layers = init_alad_params(kp, input_dim, latent_dim)

    x_hat, prob = alad_forward(x, layers)
    x_hat, prob = jax.block_until_ready((x_hat, prob))

    ref_xhat, ref_prob = reference_forward(x, layers)

    assert x_hat.shape == (batch, input_dim)
    assert prob.shape == (batch, 1)
    # bf16 weights/activations + composed layer + approx reciprocal -> moderate tolerance
    # against the exact f32 reference of the original module.
    assert jnp.allclose(x_hat, ref_xhat, atol=3e-2, rtol=3e-2), "x_hat mismatch"
    assert jnp.allclose(prob, ref_prob, atol=1.5e-2, rtol=3e-2), "prob mismatch"

    print("KERNEL_OK")
</pallas_src>

<mosaic_0001>
module attributes {stable_mosaic.version = 11 : i64} {
  func.func @kernel(%arg0: i32, %arg1: memref<128x64xf32, #tpu.memory_space<vmem>>, %arg2: memref<9x128x128xbf16, #tpu.memory_space<vmem>>, %arg3: memref<9x1x128xf32, #tpu.memory_space<vmem>>, %arg4: memref<128x128xf32, #tpu.memory_space<vmem>>) attributes {dimension_semantics = [#tpu.dimension_semantics<parallel>], iteration_bounds = array<i64: 1>, scalar_prefetch = 0 : i64, scratch_operands = 0 : i64, tpu.core_type = #tpu.core_type<tc>, window_params = [{transform_indices = @transform_0, window_bounds = array<i64: 128, 64>}, {pipeline_mode = #tpu.pipeline_mode<synchronous>, transform_indices = @transform_1, window_bounds = array<i64: 9, 128, 128>}, {pipeline_mode = #tpu.pipeline_mode<synchronous>, transform_indices = @transform_2, window_bounds = array<i64: 9, 1, 128>}, {transform_indices = @transform_3, window_bounds = array<i64: 128, 128>}]} {
    %c0 = arith.constant 0 : index
    %c0_0 = arith.constant 0 : index
    %0 = vector.load %arg1[%c0, %c0_0] : memref<128x64xf32, #tpu.memory_space<vmem>>, vector<128x64xf32>
    %1 = arith.truncf %0 : vector<128x64xf32> to vector<128x64xbf16>
    %c0_1 = arith.constant 0 : index
    %c0_2 = arith.constant 0 : index
    %c0_3 = arith.constant 0 : index
    %2 = vector.load %arg2[%c0_1, %c0_2, %c0_3] : memref<9x128x128xbf16, #tpu.memory_space<vmem>>, vector<1x128x128xbf16>
    %3 = vector.shape_cast %2 : vector<1x128x128xbf16> to vector<128x128xbf16>
    %4 = vector.extract_strided_slice %3 {offsets = [0, 0], sizes = [64, 128], strides = [1, 1]} : vector<128x128xbf16> to vector<64x128xbf16>
    %cst = arith.constant dense<0.000000e+00> : vector<128x128xf32>
    %5 = tpu.matmul %1, %4, %cst {dimension_numbers = #tpu.dot_dimension_numbers<[1], [0], [0], [1], [0, 0, 1, 1], [], []>} : vector<128x64xbf16>, vector<64x128xbf16>, vector<128x128xf32> -> vector<128x128xf32>
    %c0_4 = arith.constant 0 : index
    %c0_5 = arith.constant 0 : index
    %c0_6 = arith.constant 0 : index
    %6 = vector.load %arg3[%c0_4, %c0_5, %c0_6] : memref<9x1x128xf32, #tpu.memory_space<vmem>>, vector<1x1x128xf32>
    %7 = vector.shape_cast %6 : vector<1x1x128xf32> to vector<1x128xf32>
    %8 = vector.broadcast %7 : vector<1x128xf32> to vector<128x128xf32>
    %9 = arith.addf %5, %8 : vector<128x128xf32>
    %cst_7 = arith.constant 0.000000e+00 : f32
    %10 = vector.broadcast %cst_7 : f32 to vector<128x128xf32>
    %11 = arith.maximumf %9, %10 : vector<128x128xf32>
    %12 = arith.truncf %11 : vector<128x128xf32> to vector<128x128xbf16>
    %c1 = arith.constant 1 : index
    %c0_8 = arith.constant 0 : index
    %c0_9 = arith.constant 0 : index
    %13 = vector.load %arg2[%c1, %c0_8, %c0_9] : memref<9x128x128xbf16, #tpu.memory_space<vmem>>, vector<1x128x128xbf16>
    %14 = vector.shape_cast %13 : vector<1x128x128xbf16> to vector<128x128xbf16>
    %cst_10 = arith.constant dense<0.000000e+00> : vector<128x128xf32>
    %15 = tpu.matmul %12, %14, %cst_10 {dimension_numbers = #tpu.dot_dimension_numbers<[1], [0], [0], [1], [0, 0, 1, 1], [], []>} : vector<128x128xbf16>, vector<128x128xbf16>, vector<128x128xf32> -> vector<128x128xf32>
    %c1_11 = arith.constant 1 : index
    %c0_12 = arith.constant 0 : index
    %c0_13 = arith.constant 0 : index
    %16 = vector.load %arg3[%c1_11, %c0_12, %c0_13] : memref<9x1x128xf32, #tpu.memory_space<vmem>>, vector<1x1x128xf32>
    %17 = vector.shape_cast %16 : vector<1x1x128xf32> to vector<1x128xf32>
    %18 = vector.broadcast %17 : vector<1x128xf32> to vector<128x128xf32>
    %19 = arith.addf %15, %18 : vector<128x128xf32>
    %cst_14 = arith.constant 0.000000e+00 : f32
    %20 = vector.broadcast %cst_14 : f32 to vector<128x128xf32>
    %21 = arith.maximumf %19, %20 : vector<128x128xf32>
    %22 = arith.truncf %21 : vector<128x128xf32> to vector<128x128xbf16>
    %c2 = arith.constant 2 : index
    %c0_15 = arith.constant 0 : index
    %c0_16 = arith.constant 0 : index
    %23 = vector.load %arg2[%c2, %c0_15, %c0_16] : memref<9x128x128xbf16, #tpu.memory_space<vmem>>, vector<1x128x128xbf16>
    %24 = vector.shape_cast %23 : vector<1x128x128xbf16> to vector<128x128xbf16>
    %cst_17 = arith.constant dense<0.000000e+00> : vector<128x128xf32>
    %25 = tpu.matmul %22, %24, %cst_17 {dimension_numbers = #tpu.dot_dimension_numbers<[1], [0], [0], [1], [0, 0, 1, 1], [], []>} : vector<128x128xbf16>, vector<128x128xbf16>, vector<128x128xf32> -> vector<128x128xf32>
    %c2_18 = arith.constant 2 : index
    %c0_19 = arith.constant 0 : index
    %c0_20 = arith.constant 0 : index
    %26 = vector.load %arg3[%c2_18, %c0_19, %c0_20] : memref<9x1x128xf32, #tpu.memory_space<vmem>>, vector<1x1x128xf32>
    %27 = vector.shape_cast %26 : vector<1x1x128xf32> to vector<1x128xf32>
    %28 = vector.broadcast %27 : vector<1x128xf32> to vector<128x128xf32>
    %29 = arith.addf %25, %28 : vector<128x128xf32>
    %cst_21 = arith.constant 0.000000e+00 : f32
    %30 = vector.broadcast %cst_21 : f32 to vector<128x128xf32>
    %31 = arith.maximumf %29, %30 : vector<128x128xf32>
    %32 = arith.truncf %31 : vector<128x128xf32> to vector<128x128xbf16>
    %c3 = arith.constant 3 : index
    %c0_22 = arith.constant 0 : index
    %c0_23 = arith.constant 0 : index
    %33 = vector.load %arg2[%c3, %c0_22, %c0_23] : memref<9x128x128xbf16, #tpu.memory_space<vmem>>, vector<1x128x128xbf16>
    %34 = vector.shape_cast %33 : vector<1x128x128xbf16> to vector<128x128xbf16>
    %cst_24 = arith.constant dense<0.000000e+00> : vector<128x128xf32>
    %35 = tpu.matmul %32, %34, %cst_24 {dimension_numbers = #tpu.dot_dimension_numbers<[1], [0], [0], [1], [0, 0, 1, 1], [], []>} : vector<128x128xbf16>, vector<128x128xbf16>, vector<128x128xf32> -> vector<128x128xf32>
    %c3_25 = arith.constant 3 : index
    %c0_26 = arith.constant 0 : index
    %c0_27 = arith.constant 0 : index
    %36 = vector.load %arg3[%c3_25, %c0_26, %c0_27] : memref<9x1x128xf32, #tpu.memory_space<vmem>>, vector<1x1x128xf32>
    %37 = vector.shape_cast %36 : vector<1x1x128xf32> to vector<1x128xf32>
    %38 = vector.broadcast %37 : vector<1x128xf32> to vector<128x128xf32>
    %39 = arith.addf %35, %38 : vector<128x128xf32>
    %cst_28 = arith.constant 0.000000e+00 : f32
    %40 = vector.broadcast %cst_28 : f32 to vector<128x128xf32>
    %41 = arith.maximumf %39, %40 : vector<128x128xf32>
    %42 = arith.truncf %41 : vector<128x128xf32> to vector<128x128xbf16>
    %c4 = arith.constant 4 : index
    %c0_29 = arith.constant 0 : index
    %c0_30 = arith.constant 0 : index
    %43 = vector.load %arg2[%c4, %c0_29, %c0_30] : memref<9x128x128xbf16, #tpu.memory_space<vmem>>, vector<1x128x128xbf16>
    %44 = vector.shape_cast %43 : vector<1x128x128xbf16> to vector<128x128xbf16>
    %cst_31 = arith.constant dense<0.000000e+00> : vector<128x128xf32>
    %45 = tpu.matmul %42, %44, %cst_31 {dimension_numbers = #tpu.dot_dimension_numbers<[1], [0], [0], [1], [0, 0, 1, 1], [], []>} : vector<128x128xbf16>, vector<128x128xbf16>, vector<128x128xf32> -> vector<128x128xf32>
    %c4_32 = arith.constant 4 : index
    %c0_33 = arith.constant 0 : index
    %c0_34 = arith.constant 0 : index
    %46 = vector.load %arg3[%c4_32, %c0_33, %c0_34] : memref<9x1x128xf32, #tpu.memory_space<vmem>>, vector<1x1x128xf32>
    %47 = vector.shape_cast %46 : vector<1x1x128xf32> to vector<1x128xf32>
    %48 = vector.broadcast %47 : vector<1x128xf32> to vector<128x128xf32>
    %49 = arith.addf %45, %48 : vector<128x128xf32>
    %50 = arith.truncf %49 : vector<128x128xf32> to vector<128x128xbf16>
    %c5 = arith.constant 5 : index
    %c0_35 = arith.constant 0 : index
    %c0_36 = arith.constant 0 : index
    %51 = vector.load %arg2[%c5, %c0_35, %c0_36] : memref<9x128x128xbf16, #tpu.memory_space<vmem>>, vector<1x128x128xbf16>
    %52 = vector.shape_cast %51 : vector<1x128x128xbf16> to vector<128x128xbf16>
    %cst_37 = arith.constant dense<0.000000e+00> : vector<128x128xf32>
    %53 = tpu.matmul %50, %52, %cst_37 {dimension_numbers = #tpu.dot_dimension_numbers<[1], [0], [0], [1], [0, 0, 1, 1], [], []>} : vector<128x128xbf16>, vector<128x128xbf16>, vector<128x128xf32> -> vector<128x128xf32>
    %c5_38 = arith.constant 5 : index
    %c0_39 = arith.constant 0 : index
    %c0_40 = arith.constant 0 : index
    %54 = vector.load %arg3[%c5_38, %c0_39, %c0_40] : memref<9x1x128xf32, #tpu.memory_space<vmem>>, vector<1x1x128xf32>
    %55 = vector.shape_cast %54 : vector<1x1x128xf32> to vector<1x128xf32>
    %56 = vector.broadcast %55 : vector<1x128xf32> to vector<128x128xf32>
    %57 = arith.addf %53, %56 : vector<128x128xf32>
    %cst_41 = arith.constant 0.000000e+00 : f32
    %58 = vector.broadcast %cst_41 : f32 to vector<128x128xf32>
    %59 = arith.maximumf %57, %58 : vector<128x128xf32>
    %60 = arith.truncf %59 : vector<128x128xf32> to vector<128x128xbf16>
    %c6 = arith.constant 6 : index
    %c0_42 = arith.constant 0 : index
    %c0_43 = arith.constant 0 : index
    %61 = vector.load %arg2[%c6, %c0_42, %c0_43] : memref<9x128x128xbf16, #tpu.memory_space<vmem>>, vector<1x128x128xbf16>
    %62 = vector.shape_cast %61 : vector<1x128x128xbf16> to vector<128x128xbf16>
    %cst_44 = arith.constant dense<0.000000e+00> : vector<128x128xf32>
    %63 = tpu.matmul %60, %62, %cst_44 {dimension_numbers = #tpu.dot_dimension_numbers<[1], [0], [0], [1], [0, 0, 1, 1], [], []>} : vector<128x128xbf16>, vector<128x128xbf16>, vector<128x128xf32> -> vector<128x128xf32>
    %c6_45 = arith.constant 6 : index
    %c0_46 = arith.constant 0 : index
    %c0_47 = arith.constant 0 : index
    %64 = vector.load %arg3[%c6_45, %c0_46, %c0_47] : memref<9x1x128xf32, #tpu.memory_space<vmem>>, vector<1x1x128xf32>
    %65 = vector.shape_cast %64 : vector<1x1x128xf32> to vector<1x128xf32>
    %66 = vector.broadcast %65 : vector<1x128xf32> to vector<128x128xf32>
    %67 = arith.addf %63, %66 : vector<128x128xf32>
    %cst_48 = arith.constant 0.000000e+00 : f32
    %68 = vector.broadcast %cst_48 : f32 to vector<128x128xf32>
    %69 = arith.maximumf %67, %68 : vector<128x128xf32>
    %70 = arith.truncf %69 : vector<128x128xf32> to vector<128x128xbf16>
    %c7 = arith.constant 7 : index
    %c0_49 = arith.constant 0 : index
    %c0_50 = arith.constant 0 : index
    %71 = vector.load %arg2[%c7, %c0_49, %c0_50] : memref<9x128x128xbf16, #tpu.memory_space<vmem>>, vector<1x128x128xbf16>
    %72 = vector.shape_cast %71 : vector<1x128x128xbf16> to vector<128x128xbf16>
    %cst_51 = arith.constant dense<0.000000e+00> : vector<128x128xf32>
    %73 = tpu.matmul %70, %72, %cst_51 {dimension_numbers = #tpu.dot_dimension_numbers<[1], [0], [0], [1], [0, 0, 1, 1], [], []>} : vector<128x128xbf16>, vector<128x128xbf16>, vector<128x128xf32> -> vector<128x128xf32>
    %c7_52 = arith.constant 7 : index
    %c0_53 = arith.constant 0 : index
    %c0_54 = arith.constant 0 : index
    %74 = vector.load %arg3[%c7_52, %c0_53, %c0_54] : memref<9x1x128xf32, #tpu.memory_space<vmem>>, vector<1x1x128xf32>
    %75 = vector.shape_cast %74 : vector<1x1x128xf32> to vector<1x128xf32>
    %76 = vector.broadcast %75 : vector<1x128xf32> to vector<128x128xf32>
    %77 = arith.addf %73, %76 : vector<128x128xf32>
    %cst_55 = arith.constant 0.000000e+00 : f32
    %78 = vector.broadcast %cst_55 : f32 to vector<128x128xf32>
    %79 = arith.maximumf %77, %78 : vector<128x128xf32>
    %80 = arith.truncf %79 : vector<128x128xf32> to vector<128x128xbf16>
    %c8 = arith.constant 8 : index
    %c0_56 = arith.constant 0 : index
    %c0_57 = arith.constant 0 : index
    %81 = vector.load %arg2[%c8, %c0_56, %c0_57] : memref<9x128x128xbf16, #tpu.memory_space<vmem>>, vector<1x128x128xbf16>
    %82 = vector.shape_cast %81 : vector<1x128x128xbf16> to vector<128x128xbf16>
    %cst_58 = arith.constant dense<0.000000e+00> : vector<128x128xf32>
    %83 = tpu.matmul %80, %82, %cst_58 {dimension_numbers = #tpu.dot_dimension_numbers<[1], [0], [0], [1], [0, 0, 1, 1], [], []>} : vector<128x128xbf16>, vector<128x128xbf16>, vector<128x128xf32> -> vector<128x128xf32>
    %c8_59 = arith.constant 8 : index
    %c0_60 = arith.constant 0 : index
    %c0_61 = arith.constant 0 : index
    %84 = vector.load %arg3[%c8_59, %c0_60, %c0_61] : memref<9x1x128xf32, #tpu.memory_space<vmem>>, vector<1x1x128xf32>
    %85 = vector.shape_cast %84 : vector<1x1x128xf32> to vector<1x128xf32>
    %86 = vector.broadcast %85 : vector<1x128xf32> to vector<128x128xf32>
    %87 = arith.addf %83, %86 : vector<128x128xf32>
    %cst_62 = arith.constant 0.000000e+00 : f32
    %88 = vector.broadcast %cst_62 : f32 to vector<128x128xf32>
    %89 = arith.subf %88, %87 : vector<128x128xf32>
    %90 = math.exp %89 : vector<128x128xf32>
    %cst_63 = arith.constant 1.000000e+00 : f32
    %91 = vector.broadcast %cst_63 : f32 to vector<128x128xf32>
    %92 = arith.addf %91, %90 : vector<128x128xf32>
    %93 = tpu.reciprocal %92 {approx = true} : vector<128x128xf32> -> vector<128x128xf32>
    %94 = tpu.iota {dimensions = array<i32: 1>} : vector<128x128xi32>
    %c127_i32 = arith.constant 127 : i32
    %95 = vector.broadcast %c127_i32 : i32 to vector<128x128xi32>
    %96 = arith.cmpi eq, %94, %95 : vector<128x128xi32>
    %97 = arith.select %96, %93, %49 : vector<128x128xi1>, vector<128x128xf32>
    %c0_64 = arith.constant 0 : index
    %c0_65 = arith.constant 0 : index
    %98 = vector.load %arg4[%c0_64, %c0_65] : memref<128x128xf32, #tpu.memory_space<vmem>>, vector<128x128xf32>
    tpu.vector_store %arg4[%c0_64, %c0_65], %97 {strides = array<i32>} : memref<128x128xf32, #tpu.memory_space<vmem>>, vector<128x128xf32>,
    return
  }
  func.func @transform_0(%arg0: i32) -> (i32, i32) {
    %c0_i32 = arith.constant 0 : i32
    %c0_i32_0 = arith.constant 0 : i32
    return %arg0, %c0_i32 : i32, i32
  }
  func.func @transform_1(%arg0: i32) -> (i32, i32, i32) {
    %c0_i32 = arith.constant 0 : i32
    %c0_i32_0 = arith.constant 0 : i32
    %c0_i32_1 = arith.constant 0 : i32
    %c0_i32_2 = arith.constant 0 : i32
    return %c0_i32, %c0_i32_0, %c0_i32_1 : i32, i32, i32
  }
  func.func @transform_2(%arg0: i32) -> (i32, i32, i32) {
    %c0_i32 = arith.constant 0 : i32
    %c0_i32_0 = arith.constant 0 : i32
    %c0_i32_1 = arith.constant 0 : i32
    %c0_i32_2 = arith.constant 0 : i32
    return %c0_i32, %c0_i32_0, %c0_i32_1 : i32, i32, i32
  }
  func.func @transform_3(%arg0: i32) -> (i32, i32) {
    %c0_i32 = arith.constant 0 : i32
    %c0_i32_0 = arith.constant 0 : i32
    return %arg0, %c0_i32 : i32, i32
  }
}

</mosaic_0001>

<llo_original>
// kernel: tpu_custom_call.1
$region0: #{tpu_custom_call.1}
  #allocation0 [shape = 'u32[]', space=smem, size = 0x4, offset = 0x4, fixed_abs, tag = 'smem constant byte address 0x4 - core index']
  #allocation1 [shape = 'u32[144,128]{1,0:T(1,128)}', space=vmem, size = 0x12000, scoped, tag = 'internal scratch']
  %s0 = inlined_call_operand.vmem [shape: f32[128,64], index: 0, kind: input, shape index: {}]
  %s1 = inlined_call_operand.hbm [shape: bf16[9,128,128], index: 1, kind: input, shape index: {}]
  %s2 = inlined_call_operand.vmem [shape: f32[9,1,128], index: 2, kind: input, shape index: {}]
  %s3 = inlined_call_operand.hbm [shape: f32[128,128], index: 3, kind: output, shape index: {}]
  %s4 = sld [smem:[#allocation0]]
  $region26: #{tpu_custom_call.1} parent=0
    _
  %s6 = ssub.s32 1, %s4
  %s7 = scalar_select 0, %s6, %s4
  $region1: #{tpu_custom_call.1} parent=0
    #allocation2 [shape = 'u8[294912]{0}', space=vmem, size = 0x48000, scoped, tag = 'input window, operand 1, single buffered']
    #allocation3 [shape = 's32[1]{0}', space=sflag, size = 0x4, scoped, tag = 'scoped memory for tpu_custom_call.1']
    #allocation4 [shape = 's32[1]{0}', space=sflag, size = 0x4, scoped, tag = 'scoped memory for tpu_custom_call.1']
    #allocation5 [shape = 'u8[65536]{0}', space=vmem, size = 0x10000, scoped, tag = 'output window, operand 0, single buffered']
    %8 = vsyncpa [#allocation3], 0
    %9 = vsyncpa [#allocation4], 0
    // Predicated region
    $region2: #{tpu_custom_call.1} parent=1 // pred_check
      _
    $region3: #{tpu_custom_call.1} parent=1 // pred_check_branch
      %11 = sbr.rel (0) target = $region5
    $region4: #{tpu_custom_call.1} parent=1 // pred_region
      _
    $region5: #{tpu_custom_call.1} parent=1 // pred_fallthru
      _
    // Predicated region
    $region6: #{tpu_custom_call.1} parent=1 // pred_check
      _
    $region7: #{tpu_custom_call.1} parent=1 // pred_check_branch
      %13 = sbr.rel (0) target = $region9
    $region8: #{tpu_custom_call.1} parent=1 // pred_region
      %s15 = ssub.s32 9216, 9216
      %16 = vsyncadd [#allocation3], %s15
      %s17 = sshll.u32 [#allocation2], 4
      %s18 = int_to_ptr.vmem [resolvable:$true] %s17
      %23 = dma.hbm_to_vmem [thread:$0]  %s1, 9216, %s18, [#allocation3], 64, 64, 4
    $region9: #{tpu_custom_call.1} parent=1 // pred_fallthru
      _
    // Predicated region
    $region10: #{tpu_custom_call.1} parent=1 // pred_check
      _
    $region11: #{tpu_custom_call.1} parent=1 // pred_check_branch
      %25 = sbr.rel (0) target = $region13
    $region12: #{tpu_custom_call.1} parent=1 // pred_region
      _
    $region13: #{tpu_custom_call.1} parent=1 // pred_fallthru
      _
    // Predicated region
    $region14: #{tpu_custom_call.1} parent=1 // pred_check
      _
    $region15: #{tpu_custom_call.1} parent=1 // pred_check_branch
      %27 = sbr.rel (0) target = $region17
    $region16: #{tpu_custom_call.1} parent=1 // pred_region
      %28 = dma.done [#allocation3], 9216
    $region17: #{tpu_custom_call.1} parent=1 // pred_fallthru
      _
    %v30 = vld [vmem:[%s0] sm:$0xff]
    %v31 = vld [vmem:[%s0 + $0x8] sm:$0xff]
    %v32 = vld [vmem:[%s0 + $0x10] sm:$0xff]
    %v33 = vld [vmem:[%s0 + $0x18] sm:$0xff]
    %v34 = vld [vmem:[%s0 + $0x20] sm:$0xff]
    %v35 = vld [vmem:[%s0 + $0x28] sm:$0xff]
    %v36 = vld [vmem:[%s0 + $0x30] sm:$0xff]
    %v37 = vld [vmem:[%s0 + $0x38] sm:$0xff]
    %v38 = vld [vmem:[%s0 + $0x40] sm:$0xff]
    %v39 = vld [vmem:[%s0 + $0x48] sm:$0xff]
    %v40 = vld [vmem:[%s0 + $0x50] sm:$0xff]
    %v41 = vld [vmem:[%s0 + $0x58] sm:$0xff]
    %v42 = vld [vmem:[%s0 + $0x60] sm:$0xff]
    %v43 = vld [vmem:[%s0 + $0x68] sm:$0xff]
    %v44 = vld [vmem:[%s0 + $0x70] sm:$0xff]
    %v45 = vld [vmem:[%s0 + $0x78] sm:$0xff]
    %v46 = vpack.c.bf16 %v31, %v30
    %v47 = vpack.c.bf16 %v33, %v32
    %v48 = vpack.c.bf16 %v35, %v34
    %v49 = vpack.c.bf16 %v37, %v36
    %v50 = vpack.c.bf16 %v39, %v38
    %v51 = vpack.c.bf16 %v41, %v40
    %v52 = vpack.c.bf16 %v43, %v42
    %v53 = vpack.c.bf16 %v45, %v44
    %v54 = vld [vmem:[#allocation2] sm:$0xf]
    %v55 = vld [vmem:[#allocation2 + $0x4] sm:$0xf]
    %v56 = vld [vmem:[#allocation2 + $0x8] sm:$0xf]
    %v57 = vld [vmem:[#allocation2 + $0xc] sm:$0xf]
    %v58 = vld [vmem:[#allocation2 + $0x10] sm:$0xf]
    %v59 = vld [vmem:[#allocation2 + $0x14] sm:$0xf]
    %v60 = vld [vmem:[#allocation2 + $0x18] sm:$0xf]
    %v61 = vld [vmem:[#allocation2 + $0x1c] sm:$0xf]
    %v62 = vld [vmem:[%s2] sm:$0x1]
    %v64 = vlaneseq
    %v65 = vshrl.u32 %v64, 7
    %v66 = vsub.s32 0, %v65
    %v67 = vrot.slane %v62, %v66
    %v77 = vunpack.c.l.b16 %v54
    %v78 = vunpack.c.l.b16 %v55
    %v79 = vunpack.c.l.b16 %v56
    %v80 = vunpack.c.l.b16 %v57
    %v81 = vunpack.c.l.b16 %v58
    %v82 = vunpack.c.l.b16 %v59
    %v83 = vunpack.c.l.b16 %v60
    %v84 = vunpack.c.l.b16 %v61
    %v85 = vpack.c.b16 %v78, %v77
    %v86 = vpack.c.b16 %v80, %v79
    %v87 = vpack.c.b16 %v82, %v81
    %v88 = vpack.c.b16 %v84, %v83
    %vm93 = vcmask 523264
    %v95 = vsel %vm93, %v46, 0
    %v98 = vsel %vm93, %v47, 0
    %v101 = vsel %vm93, %v48, 0
    %v104 = vsel %vm93, %v49, 0
    %v107 = vsel %vm93, %v50, 0
    %v110 = vsel %vm93, %v51, 0
    %v113 = vsel %vm93, %v52, 0
    %v116 = vsel %vm93, %v53, 0
    %118 = vmatprep.subr.bf16.mxu0 0
    %119 = vmatpush1.bf16.msra.mxu0 %v85
    %120 = vmatprep.subr.bf16.mxu0 0
    %121 = vmatpush1.bf16.msra.mxu0 %v86
    %122 = vmatprep.subr.bf16.mxu0 0
    %123 = vmatpush1.bf16.msra.mxu0 %v87
    %124 = vmatprep.subr.bf16.mxu0 0
    %125 = vmatpush1.bf16.msra.mxu0 %v88
    %126 = vmatprep.subr.bf16.mxu0 0
    %127 = vmatpush1.bf16.msra.mxu0 0
    %128 = vmatprep.subr.bf16.mxu0 0
    %129 = vmatpush1.bf16.msra.mxu0 0
    %130 = vmatprep.subr.bf16.mxu0 0
    %131 = vmatpush1.bf16.msra.mxu0 0
    %132 = vmatprep.subr.bf16.mxu0 0
    %133 = vmatpush1.bf16.msra.mxu0 0
    %134 = vmatprep.subr.bf16.mxu0 0
    %135 = vmatpush1.bf16.msra.mxu0 0
    %136 = vmatprep.subr.bf16.mxu0 0
    %137 = vmatpush1.bf16.msra.mxu0 0
    %138 = vmatprep.subr.bf16.mxu0 0
    %139 = vmatpush1.bf16.msra.mxu0 0
    %140 = vmatprep.subr.bf16.mxu0 0
    %141 = vmatpush1.bf16.msra.mxu0 0
    %142 = vmatprep.subr.bf16.mxu0 0
    %143 = vmatpush1.bf16.msra.mxu0 0
    %144 = vmatprep.subr.bf16.mxu0 0
    %145 = vmatpush1.bf16.msra.mxu0 0
    %146 = vmatprep.subr.bf16.mxu0 0
    %147 = vmatpush1.bf16.msra.mxu0 0
    %148 = vmatprep.subr.bf16.mxu0 0
    %149 = vmatpush1.bf16.msra.mxu0 0
    %150 = vmatprep.mubr.bf16.mxu0 0
    %151 = vmatmul.mubr.bf16.gmra.mrb[0].mxu0 %v95
    %v152 = vpop.f32.mrb[0].mxu0
    %v153 = vadd.f32 %v67, %v152
    %v154 = vpop.f32.mrb[0].mxu0
    %v155 = vpop.f32.mrb[0].mxu0
    %v156 = vadd.f32 %v67, %v155
    %v157 = vpop.f32.mrb[0].mxu0
    %158 = vmatprep.mubr.bf16.mxu0 0
    %159 = vmatmul.mubr.bf16.gmra.mrb[0].mxu0 %v98
    %v160 = vpop.f32.mrb[0].mxu0
    %v161 = vadd.f32 %v67, %v160
    %v162 = vpop.f32.mrb[0].mxu0
    %v163 = vpop.f32.mrb[0].mxu0
    %v164 = vadd.f32 %v67, %v163
    %v165 = vpop.f32.mrb[0].mxu0
    %166 = vmatprep.mubr.bf16.mxu0 0
    %167 = vmatmul.mubr.bf16.gmra.mrb[0].mxu0 %v101
    %v168 = vpop.f32.mrb[0].mxu0
    %v169 = vadd.f32 %v67, %v168
    %v170 = vpop.f32.mrb[0].mxu0
    %v171 = vpop.f32.mrb[0].mxu0
    %v172 = vadd.f32 %v67, %v171
    %v173 = vpop.f32.mrb[0].mxu0
    %174 = vmatprep.mubr.bf16.mxu0 0
    %175 = vmatmul.mubr.bf16.gmra.mrb[0].mxu0 %v104
    %v176 = vpop.f32.mrb[0].mxu0
    %v177 = vadd.f32 %v67, %v176
    %v178 = vpop.f32.mrb[0].mxu0
    %v179 = vpop.f32.mrb[0].mxu0
    %v180 = vadd.f32 %v67, %v179
    %v181 = vpop.f32.mrb[0].mxu0
    %182 = vmatprep.mubr.bf16.mxu0 0
    %183 = vmatmul.mubr.bf16.gmra.mrb[0].mxu0 %v107
    %v184 = vpop.f32.mrb[0].mxu0
    %v185 = vadd.f32 %v67, %v184
    %v186 = vpop.f32.mrb[0].mxu0
    %v187 = vpop.f32.mrb[0].mxu0
    %v188 = vadd.f32 %v67, %v187
    %v189 = vpop.f32.mrb[0].mxu0
    %190 = vmatprep.mubr.bf16.mxu0 0
    %191 = vmatmul.mubr.bf16.gmra.mrb[0].mxu0 %v110
    %v192 = vpop.f32.mrb[0].mxu0
    %v193 = vadd.f32 %v67, %v192
    %v194 = vpop.f32.mrb[0].mxu0
    %v195 = vpop.f32.mrb[0].mxu0
    %v196 = vadd.f32 %v67, %v195
    %v197 = vpop.f32.mrb[0].mxu0
    %198 = vmatprep.mubr.bf16.mxu0 0
    %199 = vmatmul.mubr.bf16.gmra.mrb[0].mxu0 %v113
    %v200 = vpop.f32.mrb[0].mxu0
    %v201 = vadd.f32 %v67, %v200
    %v202 = vpop.f32.mrb[0].mxu0
    %v203 = vpop.f32.mrb[0].mxu0
    %v204 = vadd.f32 %v67, %v203
    %v205 = vpop.f32.mrb[0].mxu0
    %206 = vmatprep.mubr.bf16.mxu0 0
    %207 = vmatmul.mubr.bf16.gmra.mrb[0].mxu0 %v116
    %v208 = vpop.f32.mrb[0].mxu0
    %v209 = vadd.f32 %v67, %v208
    %v210 = vpop.f32.mrb[0].mxu0
    %v211 = vpop.f32.mrb[0].mxu0
    %v212 = vadd.f32 %v67, %v211
    %v213 = vpop.f32.mrb[0].mxu0
    %214 = vdwg.mxu0
    %v215 = vmax.f32 %v153, 0.0
    %v216 = vmax.f32 %v156, 0.0
    %v217 = vmax.f32 %v161, 0.0
    %v218 = vmax.f32 %v164, 0.0
    %v219 = vmax.f32 %v169, 0.0
    %v220 = vmax.f32 %v172, 0.0
    %v221 = vmax.f32 %v177, 0.0
    %v222 = vmax.f32 %v180, 0.0
    %v223 = vmax.f32 %v185, 0.0
    %v224 = vmax.f32 %v188, 0.0
    %v225 = vmax.f32 %v193, 0.0
    %v226 = vmax.f32 %v196, 0.0
    %v227 = vmax.f32 %v201, 0.0
    %v228 = vmax.f32 %v204, 0.0
    %v229 = vmax.f32 %v209, 0.0
    %v230 = vmax.f32 %v212, 0.0
    %v231 = vpack.c.bf16 %v216, %v215
    %v232 = vpack.c.bf16 %v218, %v217
    %v233 = vpack.c.bf16 %v220, %v219
    %v234 = vpack.c.bf16 %v222, %v221
    %v235 = vpack.c.bf16 %v224, %v223
    %v236 = vpack.c.bf16 %v226, %v225
    %v237 = vpack.c.bf16 %v228, %v227
    %v238 = vpack.c.bf16 %v230, %v229
    %s239 = scalar_lea.vmem [#allocation2], 64
    %v240 = vld [vmem:[%s239] sm:$0xf]
    %v241 = vld [vmem:[%s239 + $0x4] sm:$0xf]
    %v242 = vld [vmem:[%s239 + $0x8] sm:$0xf]
    %v243 = vld [vmem:[%s239 + $0xc] sm:$0xf]
    %v244 = vld [vmem:[%s239 + $0x10] sm:$0xf]
    %v245 = vld [vmem:[%s239 + $0x14] sm:$0xf]
    %v246 = vld [vmem:[%s239 + $0x18] sm:$0xf]
    %v247 = vld [vmem:[%s239 + $0x1c] sm:$0xf]
    %v248 = vld [vmem:[%s239 + $0x20] sm:$0xf]
    %v249 = vld [vmem:[%s239 + $0x24] sm:$0xf]
    %v250 = vld [vmem:[%s239 + $0x28] sm:$0xf]
    %v251 = vld [vmem:[%s239 + $0x2c] sm:$0xf]
    %v252 = vld [vmem:[%s239 + $0x30] sm:$0xf]
    %v253 = vld [vmem:[%s239 + $0x34] sm:$0xf]
    %v254 = vld [vmem:[%s239 + $0x38] sm:$0xf]
    %v255 = vld [vmem:[%s239 + $0x3c] sm:$0xf]
    %s256 = scalar_lea.vmem %s2, 1
    %v257 = vld [vmem:[%s256] sm:$0x1]
    %v259 = vlaneseq
    %v260 = vshrl.u32 %v259, 7
    %v261 = vsub.s32 0, %v260
    %v262 = vrot.slane %v257, %v261
    %v280 = vunpack.c.l.b16 %v240
    %v281 = vunpack.c.l.b16 %v241
    %v282 = vunpack.c.l.b16 %v242
    %v283 = vunpack.c.l.b16 %v243
    %v284 = vunpack.c.l.b16 %v244
    %v285 = vunpack.c.l.b16 %v245
    %v286 = vunpack.c.l.b16 %v246
    %v287 = vunpack.c.l.b16 %v247
    %v288 = vunpack.c.l.b16 %v248
    %v289 = vunpack.c.l.b16 %v249
    %v290 = vunpack.c.l.b16 %v250
    %v291 = vunpack.c.l.b16 %v251
    %v292 = vunpack.c.l.b16 %v252
    %v293 = vunpack.c.l.b16 %v253
    %v294 = vunpack.c.l.b16 %v254
    %v295 = vunpack.c.l.b16 %v255
    %v296 = vpack.c.b16 %v281, %v280
    %v297 = vpack.c.b16 %v283, %v282
    %v298 = vpack.c.b16 %v285, %v284
    %v299 = vpack.c.b16 %v287, %v286
    %v300 = vpack.c.b16 %v289, %v288
    %v301 = vpack.c.b16 %v291, %v290
    %v302 = vpack.c.b16 %v293, %v292
    %v303 = vpack.c.b16 %v295, %v294
    %312 = vmatprep.subr.bf16.mxu0 0
    %313 = vmatpush1.bf16.msra.mxu0 %v296
    %314 = vmatprep.subr.bf16.mxu0 0
    %315 = vmatpush1.bf16.msra.mxu0 %v297
    %316 = vmatprep.subr.bf16.mxu0 0
    %317 = vmatpush1.bf16.msra.mxu0 %v298
    %318 = vmatprep.subr.bf16.mxu0 0
    %319 = vmatpush1.bf16.msra.mxu0 %v299
    %320 = vmatprep.subr.bf16.mxu0 0
    %321 = vmatpush1.bf16.msra.mxu0 %v300
    %322 = vmatprep.subr.bf16.mxu0 0
    %323 = vmatpush1.bf16.msra.mxu0 %v301
    %324 = vmatprep.subr.bf16.mxu0 0
    %325 = vmatpush1.bf16.msra.mxu0 %v302
    %326 = vmatprep.subr.bf16.mxu0 0
    %327 = vmatpush1.bf16.msra.mxu0 %v303
    %328 = vmatprep.subr.bf16.mxu0 0
    %329 = vmatpush1.bf16.msra.mxu0 0
    %330 = vmatprep.subr.bf16.mxu0 0
    %331 = vmatpush1.bf16.msra.mxu0 0
    %332 = vmatprep.subr.bf16.mxu0 0
    %333 = vmatpush1.bf16.msra.mxu0 0
    %334 = vmatprep.subr.bf16.mxu0 0
    %335 = vmatpush1.bf16.msra.mxu0 0
    %336 = vmatprep.subr.bf16.mxu0 0
    %337 = vmatpush1.bf16.msra.mxu0 0
    %338 = vmatprep.subr.bf16.mxu0 0
    %339 = vmatpush1.bf16.msra.mxu0 0
    %340 = vmatprep.subr.bf16.mxu0 0
    %341 = vmatpush1.bf16.msra.mxu0 0
    %342 = vmatprep.subr.bf16.mxu0 0
    %343 = vmatpush1.bf16.msra.mxu0 0
    %344 = vmatprep.mubr.bf16.mxu0 0
    %345 = vmatmul.mubr.bf16.gmra.mrb[0].mxu0 %v231
    %v346 = vpop.f32.mrb[0].mxu0
    %v347 = vadd.f32 %v262, %v346
    %v348 = vpop.f32.mrb[0].mxu0
    %v349 = vpop.f32.mrb[0].mxu0
    %v350 = vadd.f32 %v262, %v349
    %v351 = vpop.f32.mrb[0].mxu0
    %352 = vmatprep.mubr.bf16.mxu0 0
    %353 = vmatmul.mubr.bf16.gmra.mrb[0].mxu0 %v232
    %v354 = vpop.f32.mrb[0].mxu0
    %v355 = vadd.f32 %v262, %v354
    %v356 = vpop.f32.mrb[0].mxu0
    %v357 = vpop.f32.mrb[0].mxu0
    %v358 = vadd.f32 %v262, %v357
    %v359 = vpop.f32.mrb[0].mxu0
    %360 = vmatprep.mubr.bf16.mxu0 0
    %361 = vmatmul.mubr.bf16.gmra.mrb[0].mxu0 %v233
    %v362 = vpop.f32.mrb[0].mxu0
    %v363 = vadd.f32 %v262, %v362
    %v364 = vpop.f32.mrb[0].mxu0
    %v365 = vpop.f32.mrb[0].mxu0
    %v366 = vadd.f32 %v262, %v365
    %v367 = vpop.f32.mrb[0].mxu0
    %368 = vmatprep.mubr.bf16.mxu0 0
    %369 = vmatmul.mubr.bf16.gmra.mrb[0].mxu0 %v234
    %v370 = vpop.f32.mrb[0].mxu0
    %v371 = vadd.f32 %v262, %v370
    %v372 = vpop.f32.mrb[0].mxu0
    %v373 = vpop.f32.mrb[0].mxu0
    %v374 = vadd.f32 %v262, %v373
    %v375 = vpop.f32.mrb[0].mxu0
    %376 = vmatprep.mubr.bf16.mxu0 0
    %377 = vmatmul.mubr.bf16.gmra.mrb[0].mxu0 %v235
    %v378 = vpop.f32.mrb[0].mxu0
    %v379 = vadd.f32 %v262, %v378
    %v380 = vpop.f32.mrb[0].mxu0
    %v381 = vpop.f32.mrb[0].mxu0
    %v382 = vadd.f32 %v262, %v381
    %v383 = vpop.f32.mrb[0].mxu0
    %384 = vmatprep.mubr.bf16.mxu0 0
    %385 = vmatmul.mubr.bf16.gmra.mrb[0].mxu0 %v236
    %v386 = vpop.f32.mrb[0].mxu0
    %v387 = vadd.f32 %v262, %v386
    %v388 = vpop.f32.mrb[0].mxu0
    %v389 = vpop.f32.mrb[0].mxu0
    %v390 = vadd.f32 %v262, %v389
    %v391 = vpop.f32.mrb[0].mxu0
    %392 = vmatprep.mubr.bf16.mxu0 0
    %393 = vmatmul.mubr.bf16.gmra.mrb[0].mxu0 %v237
    %v394 = vpop.f32.mrb[0].mxu0
    %v395 = vadd.f32 %v262, %v394
    %v396 = vpop.f32.mrb[0].mxu0
    %v397 = vpop.f32.mrb[0].mxu0
    %v398 = vadd.f32 %v262, %v397
    %v399 = vpop.f32.mrb[0].mxu0
    %400 = vmatprep.mubr.bf16.mxu0 0
    %401 = vmatmul.mubr.bf16.gmra.mrb[0].mxu0 %v238
    %v402 = vpop.f32.mrb[0].mxu0
    %v403 = vadd.f32 %v262, %v402
    %v404 = vpop.f32.mrb[0].mxu0
    %v405 = vpop.f32.mrb[0].mxu0
    %v406 = vadd.f32 %v262, %v405
    %v407 = vpop.f32.mrb[0].mxu0
    %408 = vdwg.mxu0
    %v409 = vmax.f32 %v347, 0.0
    %v410 = vmax.f32 %v350, 0.0
    %v411 = vmax.f32 %v355, 0.0
    %v412 = vmax.f32 %v358, 0.0
    %v413 = vmax.f32 %v363, 0.0
    %v414 = vmax.f32 %v366, 0.0
    %v415 = vmax.f32 %v371, 0.0
    %v416 = vmax.f32 %v374, 0.0
    %v417 = vmax.f32 %v379, 0.0
    %v418 = vmax.f32 %v382, 0.0
    %v419 = vmax.f32 %v387, 0.0
    %v420 = vmax.f32 %v390, 0.0
    %v421 = vmax.f32 %v395, 0.0
    %v422 = vmax.f32 %v398, 0.0
    %v423 = vmax.f32 %v403, 0.0
    %v424 = vmax.f32 %v406, 0.0
    %v425 = vpack.c.bf16 %v410, %v409
    %v426 = vpack.c.bf16 %v412, %v411
    %v427 = vpack.c.bf16 %v414, %v413
    %v428 = vpack.c.bf16 %v416, %v415
    %v429 = vpack.c.bf16 %v418, %v417
    %v430 = vpack.c.bf16 %v420, %v419
    %v431 = vpack.c.bf16 %v422, %v421
    %v432 = vpack.c.bf16 %v424, %v423
    %s433 = scalar_lea.vmem [#allocation2], 128
    %v434 = vld [vmem:[%s433] sm:$0xf]
    %v435 = vld [vmem:[%s433 + $0x4] sm:$0xf]
    %v436 = vld [vmem:[%s433 + $0x8] sm:$0xf]
    %v437 = vld [vmem:[%s433 + $0xc] sm:$0xf]
    %v438 = vld [vmem:[%s433 + $0x10] sm:$0xf]
    %v439 = vld [vmem:[%s433 + $0x14] sm:$0xf]
    %v440 = vld [vmem:[%s433 + $0x18] sm:$0xf]
    %v441 = vld [vmem:[%s433 + $0x1c] sm:$0xf]
    %v442 = vld [vmem:[%s433 + $0x20] sm:$0xf]
    %v443 = vld [vmem:[%s433 + $0x24] sm:$0xf]
    %v444 = vld [vmem:[%s433 + $0x28] sm:$0xf]
    %v445 = vld [vmem:[%s433 + $0x2c] sm:$0xf]
    %v446 = vld [vmem:[%s433 + $0x30] sm:$0xf]
    %v447 = vld [vmem:[%s433 + $0x34] sm:$0xf]
    %v448 = vld [vmem:[%s433 + $0x38] sm:$0xf]
    %v449 = vld [vmem:[%s433 + $0x3c] sm:$0xf]
    %s450 = scalar_lea.vmem %s2, 2
    %v451 = vld [vmem:[%s450] sm:$0x1]
    %v453 = vlaneseq
    %v454 = vshrl.u32 %v453, 7
    %v455 = vsub.s32 0, %v454
    %v456 = vrot.slane %v451, %v455
    %v474 = vunpack.c.l.b16 %v434
    %v475 = vunpack.c.l.b16 %v435
    %v476 = vunpack.c.l.b16 %v436
    %v477 = vunpack.c.l.b16 %v437
    %v478 = vunpack.c.l.b16 %v438
    %v479 = vunpack.c.l.b16 %v439
    %v480 = vunpack.c.l.b16 %v440
    %v481 = vunpack.c.l.b16 %v441
    %v482 = vunpack.c.l.b16 %v442
    %v483 = vunpack.c.l.b16 %v443
    %v484 = vunpack.c.l.b16 %v444
    %v485 = vunpack.c.l.b16 %v445
    %v486 = vunpack.c.l.b16 %v446
    %v487 = vunpack.c.l.b16 %v447
    %v488 = vunpack.c.l.b16 %v448
    %v489 = vunpack.c.l.b16 %v449
    %v490 = vpack.c.b16 %v475, %v474
    %v491 = vpack.c.b16 %v477, %v476
    %v492 = vpack.c.b16 %v479, %v478
    %v493 = vpack.c.b16 %v481, %v480
    %v494 = vpack.c.b16 %v483, %v482
    %v495 = vpack.c.b16 %v485, %v484
    %v496 = vpack.c.b16 %v487, %v486
    %v497 = vpack.c.b16 %v489, %v488
    %506 = vmatprep.subr.bf16.mxu0 0
    %507 = vmatpush1.bf16.msra.mxu0 %v490
    %508 = vmatprep.subr.bf16.mxu0 0
    %509 = vmatpush1.bf16.msra.mxu0 %v491
    %510 = vmatprep.subr.bf16.mxu0 0
    %511 = vmatpush1.bf16.msra.mxu0 %v492
    %512 = vmatprep.subr.bf16.mxu0 0
    %513 = vmatpush1.bf16.msra.mxu0 %v493
    %514 = vmatprep.subr.bf16.mxu0 0
    %515 = vmatpush1.bf16.msra.mxu0 %v494
    %516 = vmatprep.subr.bf16.mxu0 0
    %517 = vmatpush1.bf16.msra.mxu0 %v495
    %518 = vmatprep.subr.bf16.mxu0 0
    %519 = vmatpush1.bf16.msra.mxu0 %v496
    %520 = vmatprep.subr.bf16.mxu0 0
    %521 = vmatpush1.bf16.msra.mxu0 %v497
    %522 = vmatprep.subr.bf16.mxu0 0
    %523 = vmatpush1.bf16.msra.mxu0 0
    %524 = vmatprep.subr.bf16.mxu0 0
    %525 = vmatpush1.bf16.msra.mxu0 0
    %526 = vmatprep.subr.bf16.mxu0 0
    %527 = vmatpush1.bf16.msra.mxu0 0
    %528 = vmatprep.subr.bf16.mxu0 0
    %529 = vmatpush1.bf16.msra.mxu0 0
    %530 = vmatprep.subr.bf16.mxu0 0
    %531 = vmatpush1.bf16.msra.mxu0 0
    %532 = vmatprep.subr.bf16.mxu0 0
    %533 = vmatpush1.bf16.msra.mxu0 0
    %534 = vmatprep.subr.bf16.mxu0 0
    %535 = vmatpush1.bf16.msra.mxu0 0
    %536 = vmatprep.subr.bf16.mxu0 0
    %537 = vmatpush1.bf16.msra.mxu0 0
    %538 = vmatprep.mubr.bf16.mxu0 0
    %539 = vmatmul.mubr.bf16.gmra.mrb[0].mxu0 %v425
    %v540 = vpop.f32.mrb[0].mxu0
    %v541 = vadd.f32 %v456, %v540
    %v542 = vpop.f32.mrb[0].mxu0
    %v543 = vpop.f32.mrb[0].mxu0
    %v544 = vadd.f32 %v456, %v543
    %v545 = vpop.f32.mrb[0].mxu0
    %546 = vmatprep.mubr.bf16.mxu0 0
    %547 = vmatmul.mubr.bf16.gmra.mrb[0].mxu0 %v426
    %v548 = vpop.f32.mrb[0].mxu0
    %v549 = vadd.f32 %v456, %v548
    %v550 = vpop.f32.mrb[0].mxu0
    %v551 = vpop.f32.mrb[0].mxu0
    %v552 = vadd.f32 %v456, %v551
    %v553 = vpop.f32.mrb[0].mxu0
    %554 = vmatprep.mubr.bf16.mxu0 0
    %555 = vmatmul.mubr.bf16.gmra.mrb[0].mxu0 %v427
    %v556 = vpop.f32.mrb[0].mxu0
    %v557 = vadd.f32 %v456, %v556
    %v558 = vpop.f32.mrb[0].mxu0
    %v559 = vpop.f32.mrb[0].mxu0
    %v560 = vadd.f32 %v456, %v559
    %v561 = vpop.f32.mrb[0].mxu0
    %562 = vmatprep.mubr.bf16.mxu0 0
    %563 = vmatmul.mubr.bf16.gmra.mrb[0].mxu0 %v428
    %v564 = vpop.f32.mrb[0].mxu0
    %v565 = vadd.f32 %v456, %v564
    %v566 = vpop.f32.mrb[0].mxu0
    %v567 = vpop.f32.mrb[0].mxu0
    %v568 = vadd.f32 %v456, %v567
    %v569 = vpop.f32.mrb[0].mxu0
    %570 = vmatprep.mubr.bf16.mxu0 0
    %571 = vmatmul.mubr.bf16.gmra.mrb[0].mxu0 %v429
    %v572 = vpop.f32.mrb[0].mxu0
    %v573 = vadd.f32 %v456, %v572
    %v574 = vpop.f32.mrb[0].mxu0
    %v575 = vpop.f32.mrb[0].mxu0
    %v576 = vadd.f32 %v456, %v575
    %v577 = vpop.f32.mrb[0].mxu0
    %578 = vmatprep.mubr.bf16.mxu0 0
    %579 = vmatmul.mubr.bf16.gmra.mrb[0].mxu0 %v430
    %v580 = vpop.f32.mrb[0].mxu0
    %v581 = vadd.f32 %v456, %v580
    %v582 = vpop.f32.mrb[0].mxu0
    %v583 = vpop.f32.mrb[0].mxu0
    %v584 = vadd.f32 %v456, %v583
    %v585 = vpop.f32.mrb[0].mxu0
    %586 = vmatprep.mubr.bf16.mxu0 0
    %587 = vmatmul.mubr.bf16.gmra.mrb[0].mxu0 %v431
    %v588 = vpop.f32.mrb[0].mxu0
    %v589 = vadd.f32 %v456, %v588
    %v590 = vpop.f32.mrb[0].mxu0
    %v591 = vpop.f32.mrb[0].mxu0
    %v592 = vadd.f32 %v456, %v591
    %v593 = vpop.f32.mrb[0].mxu0
    %594 = vmatprep.mubr.bf16.mxu0 0
    %595 = vmatmul.mubr.bf16.gmra.mrb[0].mxu0 %v432
    %v596 = vpop.f32.mrb[0].mxu0
    %v597 = vadd.f32 %v456, %v596
    %v598 = vpop.f32.mrb[0].mxu0
    %v599 = vpop.f32.mrb[0].mxu0
    %v600 = vadd.f32 %v456, %v599
    %v601 = vpop.f32.mrb[0].mxu0
    %602 = vdwg.mxu0
    %v603 = vmax.f32 %v541, 0.0
    %v604 = vmax.f32 %v544, 0.0
    %v605 = vmax.f32 %v549, 0.0
    %v606 = vmax.f32 %v552, 0.0
    %v607 = vmax.f32 %v557, 0.0
    %v608 = vmax.f32 %v560, 0.0
    %v609 = vmax.f32 %v565, 0.0
    %v610 = vmax.f32 %v568, 0.0
    %v611 = vmax.f32 %v573, 0.0
    %v612 = vmax.f32 %v576, 0.0
    %v613 = vmax.f32 %v581, 0.0
    %v614 = vmax.f32 %v584, 0.0
    %v615 = vmax.f32 %v589, 0.0
    %v616 = vmax.f32 %v592, 0.0
    %v617 = vmax.f32 %v597, 0.0
    %v618 = vmax.f32 %v600, 0.0
    %v619 = vpack.c.bf16 %v604, %v603
    %v620 = vpack.c.bf16 %v606, %v605
    %v621 = vpack.c.bf16 %v608, %v607
    %v622 = vpack.c.bf16 %v610, %v609
    %v623 = vpack.c.bf16 %v612, %v611
    %v624 = vpack.c.bf16 %v614, %v613
    %v625 = vpack.c.bf16 %v616, %v615
    %v626 = vpack.c.bf16 %v618, %v617
    %s627 = scalar_lea.vmem [#allocation2], 192
    %v628 = vld [vmem:[%s627] sm:$0xf]
    %v629 = vld [vmem:[%s627 + $0x4] sm:$0xf]
    %v630 = vld [vmem:[%s627 + $0x8] sm:$0xf]
    %v631 = vld [vmem:[%s627 + $0xc] sm:$0xf]
    %v632 = vld [vmem:[%s627 + $0x10] sm:$0xf]
    %v633 = vld [vmem:[%s627 + $0x14] sm:$0xf]
    %v634 = vld [vmem:[%s627 + $0x18] sm:$0xf]
    %v635 = vld [vmem:[%s627 + $0x1c] sm:$0xf]
    %v636 = vld [vmem:[%s627 + $0x20] sm:$0xf]
    %v637 = vld [vmem:[%s627 + $0x24] sm:$0xf]
    %v638 = vld [vmem:[%s627 + $0x28] sm:$0xf]
    %v639 = vld [vmem:[%s627 + $0x2c] sm:$0xf]
    %v640 = vld [vmem:[%s627 + $0x30] sm:$0xf]
    %v641 = vld [vmem:[%s627 + $0x34] sm:$0xf]
    %v642 = vld [vmem:[%s627 + $0x38] sm:$0xf]
    %v643 = vld [vmem:[%s627 + $0x3c] sm:$0xf]
    %s644 = scalar_lea.vmem %s2, 3
    %v645 = vld [vmem:[%s644] sm:$0x1]
    %v647 = vlaneseq
    %v648 = vshrl.u32 %v647, 7
    %v649 = vsub.s32 0, %v648
    %v650 = vrot.slane %v645, %v649
    %v668 = vunpack.c.l.b16 %v628
    %v669 = vunpack.c.l.b16 %v629
    %v670 = vunpack.c.l.b16 %v630
    %v671 = vunpack.c.l.b16 %v631
    %v672 = vunpack.c.l.b16 %v632
    %v673 = vunpack.c.l.b16 %v633
    %v674 = vunpack.c.l.b16 %v634
    %v675 = vunpack.c.l.b16 %v635
    %v676 = vunpack.c.l.b16 %v636
    %v677 = vunpack.c.l.b16 %v637
    %v678 = vunpack.c.l.b16 %v638
    %v679 = vunpack.c.l.b16 %v639
    %v680 = vunpack.c.l.b16 %v640
    %v681 = vunpack.c.l.b16 %v641
    %v682 = vunpack.c.l.b16 %v642
    %v683 = vunpack.c.l.b16 %v643
    %v684 = vpack.c.b16 %v669, %v668
    %v685 = vpack.c.b16 %v671, %v670
    %v686 = vpack.c.b16 %v673, %v672
    %v687 = vpack.c.b16 %v675, %v674
    %v688 = vpack.c.b16 %v677, %v676
    %v689 = vpack.c.b16 %v679, %v678
    %v690 = vpack.c.b16 %v681, %v680
    %v691 = vpack.c.b16 %v683, %v682
    %700 = vmatprep.subr.bf16.mxu0 0
    %701 = vmatpush1.bf16.msra.mxu0 %v684
    %702 = vmatprep.subr.bf16.mxu0 0
    %703 = vmatpush1.bf16.msra.mxu0 %v685
    %704 = vmatprep.subr.bf16.mxu0 0
    %705 = vmatpush1.bf16.msra.mxu0 %v686
    %706 = vmatprep.subr.bf16.mxu0 0
    %707 = vmatpush1.bf16.msra.mxu0 %v687
    %708 = vmatprep.subr.bf16.mxu0 0
    %709 = vmatpush1.bf16.msra.mxu0 %v688
    %710 = vmatprep.subr.bf16.mxu0 0
    %711 = vmatpush1.bf16.msra.mxu0 %v689
    %712 = vmatprep.subr.bf16.mxu0 0
    %713 = vmatpush1.bf16.msra.mxu0 %v690
    %714 = vmatprep.subr.bf16.mxu0 0
    %715 = vmatpush1.bf16.msra.mxu0 %v691
    %716 = vmatprep.subr.bf16.mxu0 0
    %717 = vmatpush1.bf16.msra.mxu0 0
    %718 = vmatprep.subr.bf16.mxu0 0
    %719 = vmatpush1.bf16.msra.mxu0 0
    %720 = vmatprep.subr.bf16.mxu0 0
    %721 = vmatpush1.bf16.msra.mxu0 0
    %722 = vmatprep.subr.bf16.mxu0 0
    %723 = vmatpush1.bf16.msra.mxu0 0
    %724 = vmatprep.subr.bf16.mxu0 0
    %725 = vmatpush1.bf16.msra.mxu0 0
    %726 = vmatprep.subr.bf16.mxu0 0
    %727 = vmatpush1.bf16.msra.mxu0 0
    %728 = vmatprep.subr.bf16.mxu0 0
    %729 = vmatpush1.bf16.msra.mxu0 0
    %730 = vmatprep.subr.bf16.mxu0 0
    %731 = vmatpush1.bf16.msra.mxu0 0
    %732 = vmatprep.mubr.bf16.mxu0 0
    %733 = vmatmul.mubr.bf16.gmra.mrb[0].mxu0 %v619
    %v734 = vpop.f32.mrb[0].mxu0
    %v735 = vadd.f32 %v650, %v734
    %v736 = vpop.f32.mrb[0].mxu0
    %v737 = vpop.f32.mrb[0].mxu0
    %v738 = vadd.f32 %v650, %v737
    %v739 = vpop.f32.mrb[0].mxu0
    %740 = vmatprep.mubr.bf16.mxu0 0
    %741 = vmatmul.mubr.bf16.gmra.mrb[0].mxu0 %v620
    %v742 = vpop.f32.mrb[0].mxu0
    %v743 = vadd.f32 %v650, %v742
    %v744 = vpop.f32.mrb[0].mxu0
    %v745 = vpop.f32.mrb[0].mxu0
    %v746 = vadd.f32 %v650, %v745
    %v747 = vpop.f32.mrb[0].mxu0
    %748 = vmatprep.mubr.bf16.mxu0 0
    %749 = vmatmul.mubr.bf16.gmra.mrb[0].mxu0 %v621
    %v750 = vpop.f32.mrb[0].mxu0
    %v751 = vadd.f32 %v650, %v750
    %v752 = vpop.f32.mrb[0].mxu0
    %v753 = vpop.f32.mrb[0].mxu0
    %v754 = vadd.f32 %v650, %v753
    %v755 = vpop.f32.mrb[0].mxu0
    %756 = vmatprep.mubr.bf16.mxu0 0
    %757 = vmatmul.mubr.bf16.gmra.mrb[0].mxu0 %v622
    %v758 = vpop.f32.mrb[0].mxu0
    %v759 = vadd.f32 %v650, %v758
    %v760 = vpop.f32.mrb[0].mxu0
    %v761 = vpop.f32.mrb[0].mxu0
    %v762 = vadd.f32 %v650, %v761
    %v763 = vpop.f32.mrb[0].mxu0
    %764 = vmatprep.mubr.bf16.mxu0 0
    %765 = vmatmul.mubr.bf16.gmra.mrb[0].mxu0 %v623
    %v766 = vpop.f32.mrb[0].mxu0
    %v767 = vadd.f32 %v650, %v766
    %v768 = vpop.f32.mrb[0].mxu0
    %v769 = vpop.f32.mrb[0].mxu0
    %v770 = vadd.f32 %v650, %v769
    %v771 = vpop.f32.mrb[0].mxu0
    %772 = vmatprep.mubr.bf16.mxu0 0
    %773 = vmatmul.mubr.bf16.gmra.mrb[0].mxu0 %v624
    %v774 = vpop.f32.mrb[0].mxu0
    %v775 = vadd.f32 %v650, %v774
    %v776 = vpop.f32.mrb[0].mxu0
    %v777 = vpop.f32.mrb[0].mxu0
    %v778 = vadd.f32 %v650, %v777
    %v779 = vpop.f32.mrb[0].mxu0
    %780 = vmatprep.mubr.bf16.mxu0 0
    %781 = vmatmul.mubr.bf16.gmra.mrb[0].mxu0 %v625
    %v782 = vpop.f32.mrb[0].mxu0
    %v783 = vadd.f32 %v650, %v782
    %v784 = vpop.f32.mrb[0].mxu0
    %v785 = vpop.f32.mrb[0].mxu0
    %v786 = vadd.f32 %v650, %v785
    %v787 = vpop.f32.mrb[0].mxu0
    %788 = vmatprep.mubr.bf16.mxu0 0
    %789 = vmatmul.mubr.bf16.gmra.mrb[0].mxu0 %v626
    %v790 = vpop.f32.mrb[0].mxu0
    %v791 = vadd.f32 %v650, %v790
    %v792 = vpop.f32.mrb[0].mxu0
    %v793 = vpop.f32.mrb[0].mxu0
    %v794 = vadd.f32 %v650, %v793
    %v795 = vpop.f32.mrb[0].mxu0
    %796 = vdwg.mxu0
    %v797 = vmax.f32 %v735, 0.0
    %v798 = vmax.f32 %v738, 0.0
    %v799 = vmax.f32 %v743, 0.0
    %v800 = vmax.f32 %v746, 0.0
    %v801 = vmax.f32 %v751, 0.0
    %v802 = vmax.f32 %v754, 0.0
    %v803 = vmax.f32 %v759, 0.0
    %v804 = vmax.f32 %v762, 0.0
    %v805 = vmax.f32 %v767, 0.0
    %v806 = vmax.f32 %v770, 0.0
    %v807 = vmax.f32 %v775, 0.0
    %v808 = vmax.f32 %v778, 0.0
    %v809 = vmax.f32 %v783, 0.0
    %v810 = vmax.f32 %v786, 0.0
    %v811 = vmax.f32 %v791, 0.0
    %v812 = vmax.f32 %v794, 0.0
    %v813 = vpack.c.bf16 %v798, %v797
    %v814 = vpack.c.bf16 %v800, %v799
    %v815 = vpack.c.bf16 %v802, %v801
    %v816 = vpack.c.bf16 %v804, %v803
    %v817 = vpack.c.bf16 %v806, %v805
    %v818 = vpack.c.bf16 %v808, %v807
    %v819 = vpack.c.bf16 %v810, %v809
    %v820 = vpack.c.bf16 %v812, %v811
    %s821 = scalar_lea.vmem [#allocation2], 256
    %v822 = vld [vmem:[%s821] sm:$0xf]
    %v823 = vld [vmem:[%s821 + $0x4] sm:$0xf]
    %v824 = vld [vmem:[%s821 + $0x8] sm:$0xf]
    %v825 = vld [vmem:[%s821 + $0xc] sm:$0xf]
    %v826 = vld [vmem:[%s821 + $0x10] sm:$0xf]
    %v827 = vld [vmem:[%s821 + $0x14] sm:$0xf]
    %v828 = vld [vmem:[%s821 + $0x18] sm:$0xf]
    %v829 = vld [vmem:[%s821 + $0x1c] sm:$0xf]
    %v830 = vld [vmem:[%s821 + $0x20] sm:$0xf]
    %v831 = vld [vmem:[%s821 + $0x24] sm:$0xf]
    %v832 = vld [vmem:[%s821 + $0x28] sm:$0xf]
    %v833 = vld [vmem:[%s821 + $0x2c] sm:$0xf]
    %v834 = vld [vmem:[%s821 + $0x30] sm:$0xf]
    %v835 = vld [vmem:[%s821 + $0x34] sm:$0xf]
    %v836 = vld [vmem:[%s821 + $0x38] sm:$0xf]
    %v837 = vld [vmem:[%s821 + $0x3c] sm:$0xf]
    %s838 = scalar_lea.vmem %s2, 4
    %v839 = vld [vmem:[%s838] sm:$0x1]
    %v841 = vlaneseq
    %v842 = vshrl.u32 %v841, 7
    %v843 = vsub.s32 0, %v842
    %v844 = vrot.slane %v839, %v843
    %v862 = vunpack.c.l.b16 %v822
    %v863 = vunpack.c.l.b16 %v823
    %v864 = vunpack.c.l.b16 %v824
    %v865 = vunpack.c.l.b16 %v825
    %v866 = vunpack.c.l.b16 %v826
    %v867 = vunpack.c.l.b16 %v827
    %v868 = vunpack.c.l.b16 %v828
    %v869 = vunpack.c.l.b16 %v829
    %v870 = vunpack.c.l.b16 %v830
    %v871 = vunpack.c.l.b16 %v831
    %v872 = vunpack.c.l.b16 %v832
    %v873 = vunpack.c.l.b16 %v833
    %v874 = vunpack.c.l.b16 %v834
    %v875 = vunpack.c.l.b16 %v835
    %v876 = vunpack.c.l.b16 %v836
    %v877 = vunpack.c.l.b16 %v837
    %v878 = vpack.c.b16 %v863, %v862
    %v879 = vpack.c.b16 %v865, %v864
    %v880 = vpack.c.b16 %v867, %v866
    %v881 = vpack.c.b16 %v869, %v868
    %v882 = vpack.c.b16 %v871, %v870
    %v883 = vpack.c.b16 %v873, %v872
    %v884 = vpack.c.b16 %v875, %v874
    %v885 = vpack.c.b16 %v877, %v876
    %894 = vmatprep.subr.bf16.mxu0 0
    %895 = vmatpush1.bf16.msra.mxu0 %v878
    %896 = vmatprep.subr.bf16.mxu0 0
    %897 = vmatpush1.bf16.msra.mxu0 %v879
    %898 = vmatprep.subr.bf16.mxu0 0
    %899 = vmatpush1.bf16.msra.mxu0 %v880
    %900 = vmatprep.subr.bf16.mxu0 0
    %901 = vmatpush1.bf16.msra.mxu0 %v881
    %902 = vmatprep.subr.bf16.mxu0 0
    %903 = vmatpush1.bf16.msra.mxu0 %v882
    %904 = vmatprep.subr.bf16.mxu0 0
    %905 = vmatpush1.bf16.msra.mxu0 %v883
    %906 = vmatprep.subr.bf16.mxu0 0
    %907 = vmatpush1.bf16.msra.mxu0 %v884
    %908 = vmatprep.subr.bf16.mxu0 0
    %909 = vmatpush1.bf16.msra.mxu0 %v885
    %910 = vmatprep.subr.bf16.mxu0 0
    %911 = vmatpush1.bf16.msra.mxu0 0
    %912 = vmatprep.subr.bf16.mxu0 0
    %913 = vmatpush1.bf16.msra.mxu0 0
    %914 = vmatprep.subr.bf16.mxu0 0
    %915 = vmatpush1.bf16.msra.mxu0 0
    %916 = vmatprep.subr.bf16.mxu0 0
    %917 = vmatpush1.bf16.msra.mxu0 0
    %918 = vmatprep.subr.bf16.mxu0 0
    %919 = vmatpush1.bf16.msra.mxu0 0
    %920 = vmatprep.subr.bf16.mxu0 0
    %921 = vmatpush1.bf16.msra.mxu0 0
    %922 = vmatprep.subr.bf16.mxu0 0
    %923 = vmatpush1.bf16.msra.mxu0 0
    %924 = vmatprep.subr.bf16.mxu0 0
    %925 = vmatpush1.bf16.msra.mxu0 0
    %926 = vmatprep.mubr.bf16.mxu0 0
    %927 = vmatmul.mubr.bf16.gmra.mrb[0].mxu0 %v813
    %v928 = vpop.f32.mrb[0].mxu0
    %v929 = vadd.f32 %v844, %v928
    %v930 = vpop.f32.mrb[0].mxu0
    %v931 = vpop.f32.mrb[0].mxu0
    %v932 = vadd.f32 %v844, %v931
    %v933 = vpop.f32.mrb[0].mxu0
    %934 = vmatprep.mubr.bf16.mxu0 0
    %935 = vmatmul.mubr.bf16.gmra.mrb[0].mxu0 %v814
    %v936 = vpop.f32.mrb[0].mxu0
    %v937 = vadd.f32 %v844, %v936
    %v938 = vpop.f32.mrb[0].mxu0
    %v939 = vpop.f32.mrb[0].mxu0
    %v940 = vadd.f32 %v844, %v939
    %v941 = vpop.f32.mrb[0].mxu0
    %942 = vmatprep.mubr.bf16.mxu0 0
    %943 = vmatmul.mubr.bf16.gmra.mrb[0].mxu0 %v815
    %v944 = vpop.f32.mrb[0].mxu0
    %v945 = vadd.f32 %v844, %v944
    %v946 = vpop.f32.mrb[0].mxu0
    %v947 = vpop.f32.mrb[0].mxu0
    %v948 = vadd.f32 %v844, %v947
    %v949 = vpop.f32.mrb[0].mxu0
    %950 = vmatprep.mubr.bf16.mxu0 0
    %951 = vmatmul.mubr.bf16.gmra.mrb[0].mxu0 %v816
    %v952 = vpop.f32.mrb[0].mxu0
    %v953 = vadd.f32 %v844, %v952
    %v954 = vpop.f32.mrb[0].mxu0
    %v955 = vpop.f32.mrb[0].mxu0
    %v956 = vadd.f32 %v844, %v955
    %v957 = vpop.f32.mrb[0].mxu0
    %958 = vmatprep.mubr.bf16.mxu0 0
    %959 = vmatmul.mubr.bf16.gmra.mrb[0].mxu0 %v817
    %v960 = vpop.f32.mrb[0].mxu0
    %v961 = vadd.f32 %v844, %v960
    %v962 = vpop.f32.mrb[0].mxu0
    %v963 = vpop.f32.mrb[0].mxu0
    %v964 = vadd.f32 %v844, %v963
    %v965 = vpop.f32.mrb[0].mxu0
    %966 = vmatprep.mubr.bf16.mxu0 0
    %967 = vmatmul.mubr.bf16.gmra.mrb[0].mxu0 %v818
    %v968 = vpop.f32.mrb[0].mxu0
    %v969 = vadd.f32 %v844, %v968
    %v970 = vpop.f32.mrb[0].mxu0
    %v971 = vpop.f32.mrb[0].mxu0
    %v972 = vadd.f32 %v844, %v971
    %v973 = vpop.f32.mrb[0].mxu0
    %974 = vmatprep.mubr.bf16.mxu0 0
    %975 = vmatmul.mubr.bf16.gmra.mrb[0].mxu0 %v819
    %v976 = vpop.f32.mrb[0].mxu0
    %v977 = vadd.f32 %v844, %v976
    %v978 = vpop.f32.mrb[0].mxu0
    %v979 = vpop.f32.mrb[0].mxu0
    %v980 = vadd.f32 %v844, %v979
    %v981 = vpop.f32.mrb[0].mxu0
    %982 = vmatprep.mubr.bf16.mxu0 0
    %983 = vmatmul.mubr.bf16.gmra.mrb[0].mxu0 %v820
    %v984 = vpop.f32.mrb[0].mxu0
    %v985 = vadd.f32 %v844, %v984
    %v986 = vpop.f32.mrb[0].mxu0
    %v987 = vpop.f32.mrb[0].mxu0
    %v988 = vadd.f32 %v844, %v987
    %v989 = vpop.f32.mrb[0].mxu0
    %990 = vdwg.mxu0
    %v991 = vpack.c.bf16 %v932, %v929
    %v992 = vpack.c.bf16 %v940, %v937
    %v993 = vpack.c.bf16 %v948, %v945
    %v994 = vpack.c.bf16 %v956, %v953
    %v995 = vpack.c.bf16 %v964, %v961
    %v996 = vpack.c.bf16 %v972, %v969
    %v997 = vpack.c.bf16 %v980, %v977
    %v998 = vpack.c.bf16 %v988, %v985
    %s999 = scalar_lea.vmem [#allocation2], 320
    %v1000 = vld [vmem:[%s999] sm:$0xf]
    %v1001 = vld [vmem:[%s999 + $0x4] sm:$0xf]
    %v1002 = vld [vmem:[%s999 + $0x8] sm:$0xf]
    %v1003 = vld [vmem:[%s999 + $0xc] sm:$0xf]
    %v1004 = vld [vmem:[%s999 + $0x10] sm:$0xf]
    %v1005 = vld [vmem:[%s999 + $0x14] sm:$0xf]
    %v1006 = vld [vmem:[%s999 + $0x18] sm:$0xf]
    %v1007 = vld [vmem:[%s999 + $0x1c] sm:$0xf]
    %v1008 = vld [vmem:[%s999 + $0x20] sm:$0xf]
    %v1009 = vld [vmem:[%s999 + $0x24] sm:$0xf]
    %v1010 = vld [vmem:[%s999 + $0x28] sm:$0xf]
    %v1011 = vld [vmem:[%s999 + $0x2c] sm:$0xf]
    %v1012 = vld [vmem:[%s999 + $0x30] sm:$0xf]
    %v1013 = vld [vmem:[%s999 + $0x34] sm:$0xf]
    %v1014 = vld [vmem:[%s999 + $0x38] sm:$0xf]
    %v1015 = vld [vmem:[%s999 + $0x3c] sm:$0xf]
    %s1016 = scalar_lea.vmem %s2, 5
    %v1017 = vld [vmem:[%s1016] sm:$0x1]
    %v1019 = vlaneseq
    %v1020 = vshrl.u32 %v1019, 7
    %v1021 = vsub.s32 0, %v1020
    %v1022 = vrot.slane %v1017, %v1021
    %v1040 = vunpack.c.l.b16 %v1000
    %v1041 = vunpack.c.l.b16 %v1001
    %v1042 = vunpack.c.l.b16 %v1002
    %v1043 = vunpack.c.l.b16 %v1003
    %v1044 = vunpack.c.l.b16 %v1004
    %v1045 = vunpack.c.l.b16 %v1005
    %v1046 = vunpack.c.l.b16 %v1006
    %v1047 = vunpack.c.l.b16 %v1007
    %v1048 = vunpack.c.l.b16 %v1008
    %v1049 = vunpack.c.l.b16 %v1009
    %v1050 = vunpack.c.l.b16 %v1010
    %v1051 = vunpack.c.l.b16 %v1011
    %v1052 = vunpack.c.l.b16 %v1012
    %v1053 = vunpack.c.l.b16 %v1013
    %v1054 = vunpack.c.l.b16 %v1014
    %v1055 = vunpack.c.l.b16 %v1015
    %v1056 = vpack.c.b16 %v1041, %v1040
    %v1057 = vpack.c.b16 %v1043, %v1042
    %v1058 = vpack.c.b16 %v1045, %v1044
    %v1059 = vpack.c.b16 %v1047, %v1046
    %v1060 = vpack.c.b16 %v1049, %v1048
    %v1061 = vpack.c.b16 %v1051, %v1050
    %v1062 = vpack.c.b16 %v1053, %v1052
    %v1063 = vpack.c.b16 %v1055, %v1054
    %1072 = vmatprep.subr.bf16.mxu0 0
    %1073 = vmatpush1.bf16.msra.mxu0 %v1056
    %1074 = vmatprep.subr.bf16.mxu0 0
    %1075 = vmatpush1.bf16.msra.mxu0 %v1057
    %1076 = vmatprep.subr.bf16.mxu0 0
    %1077 = vmatpush1.bf16.msra.mxu0 %v1058
    %1078 = vmatprep.subr.bf16.mxu0 0
    %1079 = vmatpush1.bf16.msra.mxu0 %v1059
    %1080 = vmatprep.subr.bf16.mxu0 0
    %1081 = vmatpush1.bf16.msra.mxu0 %v1060
    %1082 = vmatprep.subr.bf16.mxu0 0
    %1083 = vmatpush1.bf16.msra.mxu0 %v1061
    %1084 = vmatprep.subr.bf16.mxu0 0
    %1085 = vmatpush1.bf16.msra.mxu0 %v1062
    %1086 = vmatprep.subr.bf16.mxu0 0
    %1087 = vmatpush1.bf16.msra.mxu0 %v1063
    %1088 = vmatprep.subr.bf16.mxu0 0
    %1089 = vmatpush1.bf16.msra.mxu0 0
    %1090 = vmatprep.subr.bf16.mxu0 0
    %1091 = vmatpush1.bf16.msra.mxu0 0
    %1092 = vmatprep.subr.bf16.mxu0 0
    %1093 = vmatpush1.bf16.msra.mxu0 0
    %1094 = vmatprep.subr.bf16.mxu0 0
    %1095 = vmatpush1.bf16.msra.mxu0 0
    %1096 = vmatprep.subr.bf16.mxu0 0
    %1097 = vmatpush1.bf16.msra.mxu0 0
    %1098 = vmatprep.subr.bf16.mxu0 0
    %1099 = vmatpush1.bf16.msra.mxu0 0
    %1100 = vmatprep.subr.bf16.mxu0 0
    %1101 = vmatpush1.bf16.msra.mxu0 0
    %1102 = vmatprep.subr.bf16.mxu0 0
    %1103 = vmatpush1.bf16.msra.mxu0 0
    %1104 = vmatprep.mubr.bf16.mxu0 0
    %1105 = vmatmul.mubr.bf16.gmra.mrb[0].mxu0 %v991
    %v1106 = vpop.f32.mrb[0].mxu0
    %v1107 = vadd.f32 %v1022, %v1106
    %v1108 = vpop.f32.mrb[0].mxu0
    %v1109 = vpop.f32.mrb[0].mxu0
    %v1110 = vadd.f32 %v1022, %v1109
    %v1111 = vpop.f32.mrb[0].mxu0
    %1112 = vmatprep.mubr.bf16.mxu0 0
    %1113 = vmatmul.mubr.bf16.gmra.mrb[0].mxu0 %v992
    %v1114 = vpop.f32.mrb[0].mxu0
    %v1115 = vadd.f32 %v1022, %v1114
    %v1116 = vpop.f32.mrb[0].mxu0
    %v1117 = vpop.f32.mrb[0].mxu0
    %v1118 = vadd.f32 %v1022, %v1117
    %v1119 = vpop.f32.mrb[0].mxu0
    %1120 = vmatprep.mubr.bf16.mxu0 0
    %1121 = vmatmul.mubr.bf16.gmra.mrb[0].mxu0 %v993
    %v1122 = vpop.f32.mrb[0].mxu0
    %v1123 = vadd.f32 %v1022, %v1122
    %v1124 = vpop.f32.mrb[0].mxu0
    %v1125 = vpop.f32.mrb[0].mxu0
    %v1126 = vadd.f32 %v1022, %v1125
    %v1127 = vpop.f32.mrb[0].mxu0
    %1128 = vmatprep.mubr.bf16.mxu0 0
    %1129 = vmatmul.mubr.bf16.gmra.mrb[0].mxu0 %v994
    %v1130 = vpop.f32.mrb[0].mxu0
    %v1131 = vadd.f32 %v1022, %v1130
    %v1132 = vpop.f32.mrb[0].mxu0
    %v1133 = vpop.f32.mrb[0].mxu0
    %v1134 = vadd.f32 %v1022, %v1133
    %v1135 = vpop.f32.mrb[0].mxu0
    %1136 = vmatprep.mubr.bf16.mxu0 0
    %1137 = vmatmul.mubr.bf16.gmra.mrb[0].mxu0 %v995
    %v1138 = vpop.f32.mrb[0].mxu0
    %v1139 = vadd.f32 %v1022, %v1138
    %v1140 = vpop.f32.mrb[0].mxu0
    %v1141 = vpop.f32.mrb[0].mxu0
    %v1142 = vadd.f32 %v1022, %v1141
    %v1143 = vpop.f32.mrb[0].mxu0
    %1144 = vmatprep.mubr.bf16.mxu0 0
    %1145 = vmatmul.mubr.bf16.gmra.mrb[0].mxu0 %v996
    %v1146 = vpop.f32.mrb[0].mxu0
    %v1147 = vadd.f32 %v1022, %v1146
    %v1148 = vpop.f32.mrb[0].mxu0
    %v1149 = vpop.f32.mrb[0].mxu0
    %v1150 = vadd.f32 %v1022, %v1149
    %v1151 = vpop.f32.mrb[0].mxu0
    %1152 = vmatprep.mubr.bf16.mxu0 0
    %1153 = vmatmul.mubr.bf16.gmra.mrb[0].mxu0 %v997
    %v1154 = vpop.f32.mrb[0].mxu0
    %v1155 = vadd.f32 %v1022, %v1154
    %v1156 = vpop.f32.mrb[0].mxu0
    %v1157 = vpop.f32.mrb[0].mxu0
    %v1158 = vadd.f32 %v1022, %v1157
    %v1159 = vpop.f32.mrb[0].mxu0
    %1160 = vmatprep.mubr.bf16.mxu0 0
    %1161 = vmatmul.mubr.bf16.gmra.mrb[0].mxu0 %v998
    %v1162 = vpop.f32.mrb[0].mxu0
    %v1163 = vadd.f32 %v1022, %v1162
    %v1164 = vpop.f32.mrb[0].mxu0
    %v1165 = vpop.f32.mrb[0].mxu0
    %v1166 = vadd.f32 %v1022, %v1165
    %v1167 = vpop.f32.mrb[0].mxu0
    %1168 = vdwg.mxu0
    %v1169 = vmax.f32 %v1107, 0.0
    %v1170 = vmax.f32 %v1110, 0.0
    %v1171 = vmax.f32 %v1115, 0.0
    %v1172 = vmax.f32 %v1118, 0.0
    %v1173 = vmax.f32 %v1123, 0.0
    %v1174 = vmax.f32 %v1126, 0.0
    %v1175 = vmax.f32 %v1131, 0.0
    %v1176 = vmax.f32 %v1134, 0.0
    %v1177 = vmax.f32 %v1139, 0.0
    %v1178 = vmax.f32 %v1142, 0.0
    %v1179 = vmax.f32 %v1147, 0.0
    %v1180 = vmax.f32 %v1150, 0.0
    %v1181 = vmax.f32 %v1155, 0.0
    %v1182 = vmax.f32 %v1158, 0.0
    %v1183 = vmax.f32 %v1163, 0.0
    %v1184 = vmax.f32 %v1166, 0.0
    %v1185 = vpack.c.bf16 %v1170, %v1169
    %v1186 = vpack.c.bf16 %v1172, %v1171
    %v1187 = vpack.c.bf16 %v1174, %v1173
    %v1188 = vpack.c.bf16 %v1176, %v1175
    %v1189 = vpack.c.bf16 %v1178, %v1177
    %v1190 = vpack.c.bf16 %v1180, %v1179
    %v1191 = vpack.c.bf16 %v1182, %v1181
    %v1192 = vpack.c.bf16 %v1184, %v1183
    %s1193 = scalar_lea.vmem [#allocation2], 384
    %v1194 = vld [vmem:[%s1193] sm:$0xf]
    %v1195 = vld [vmem:[%s1193 + $0x4] sm:$0xf]
    %v1196 = vld [vmem:[%s1193 + $0x8] sm:$0xf]
    %v1197 = vld [vmem:[%s1193 + $0xc] sm:$0xf]
    %v1198 = vld [vmem:[%s1193 + $0x10] sm:$0xf]
    %v1199 = vld [vmem:[%s1193 + $0x14] sm:$0xf]
    %v1200 = vld [vmem:[%s1193 + $0x18] sm:$0xf]
    %v1201 = vld [vmem:[%s1193 + $0x1c] sm:$0xf]
    %v1202 = vld [vmem:[%s1193 + $0x20] sm:$0xf]
    %v1203 = vld [vmem:[%s1193 + $0x24] sm:$0xf]
    %v1204 = vld [vmem:[%s1193 + $0x28] sm:$0xf]
    %v1205 = vld [vmem:[%s1193 + $0x2c] sm:$0xf]
    %v1206 = vld [vmem:[%s1193 + $0x30] sm:$0xf]
    %v1207 = vld [vmem:[%s1193 + $0x34] sm:$0xf]
    %v1208 = vld [vmem:[%s1193 + $0x38] sm:$0xf]
    %v1209 = vld [vmem:[%s1193 + $0x3c] sm:$0xf]
    %s1210 = scalar_lea.vmem %s2, 6
    %v1211 = vld [vmem:[%s1210] sm:$0x1]
    %v1213 = vlaneseq
    %v1214 = vshrl.u32 %v1213, 7
    %v1215 = vsub.s32 0, %v1214
    %v1216 = vrot.slane %v1211, %v1215
    %v1234 = vunpack.c.l.b16 %v1194
    %v1235 = vunpack.c.l.b16 %v1195
    %v1236 = vunpack.c.l.b16 %v1196
    %v1237 = vunpack.c.l.b16 %v1197
    %v1238 = vunpack.c.l.b16 %v1198
    %v1239 = vunpack.c.l.b16 %v1199
    %v1240 = vunpack.c.l.b16 %v1200
    %v1241 = vunpack.c.l.b16 %v1201
    %v1242 = vunpack.c.l.b16 %v1202
    %v1243 = vunpack.c.l.b16 %v1203
    %v1244 = vunpack.c.l.b16 %v1204
    %v1245 = vunpack.c.l.b16 %v1205
    %v1246 = vunpack.c.l.b16 %v1206
    %v1247 = vunpack.c.l.b16 %v1207
    %v1248 = vunpack.c.l.b16 %v1208
    %v1249 = vunpack.c.l.b16 %v1209
    %v1250 = vpack.c.b16 %v1235, %v1234
    %v1251 = vpack.c.b16 %v1237, %v1236
    %v1252 = vpack.c.b16 %v1239, %v1238
    %v1253 = vpack.c.b16 %v1241, %v1240
    %v1254 = vpack.c.b16 %v1243, %v1242
    %v1255 = vpack.c.b16 %v1245, %v1244
    %v1256 = vpack.c.b16 %v1247, %v1246
    %v1257 = vpack.c.b16 %v1249, %v1248
    %1266 = vmatprep.subr.bf16.mxu0 0
    %1267 = vmatpush1.bf16.msra.mxu0 %v1250
    %1268 = vmatprep.subr.bf16.mxu0 0
    %1269 = vmatpush1.bf16.msra.mxu0 %v1251
    %1270 = vmatprep.subr.bf16.mxu0 0
    %1271 = vmatpush1.bf16.msra.mxu0 %v1252
    %1272 = vmatprep.subr.bf16.mxu0 0
    %1273 = vmatpush1.bf16.msra.mxu0 %v1253
    %1274 = vmatprep.subr.bf16.mxu0 0
    %1275 = vmatpush1.bf16.msra.mxu0 %v1254
    %1276 = vmatprep.subr.bf16.mxu0 0
    %1277 = vmatpush1.bf16.msra.mxu0 %v1255
    %1278 = vmatprep.subr.bf16.mxu0 0
    %1279 = vmatpush1.bf16.msra.mxu0 %v1256
    %1280 = vmatprep.subr.bf16.mxu0 0
    %1281 = vmatpush1.bf16.msra.mxu0 %v1257
    %1282 = vmatprep.subr.bf16.mxu0 0
    %1283 = vmatpush1.bf16.msra.mxu0 0
    %1284 = vmatprep.subr.bf16.mxu0 0
    %1285 = vmatpush1.bf16.msra.mxu0 0
    %1286 = vmatprep.subr.bf16.mxu0 0
    %1287 = vmatpush1.bf16.msra.mxu0 0
    %1288 = vmatprep.subr.bf16.mxu0 0
    %1289 = vmatpush1.bf16.msra.mxu0 0
    %1290 = vmatprep.subr.bf16.mxu0 0
    %1291 = vmatpush1.bf16.msra.mxu0 0
    %1292 = vmatprep.subr.bf16.mxu0 0
    %1293 = vmatpush1.bf16.msra.mxu0 0
    %1294 = vmatprep.subr.bf16.mxu0 0
    %1295 = vmatpush1.bf16.msra.mxu0 0
    %1296 = vmatprep.subr.bf16.mxu0 0
    %1297 = vmatpush1.bf16.msra.mxu0 0
    %1298 = vmatprep.mubr.bf16.mxu0 0
    %1299 = vmatmul.mubr.bf16.gmra.mrb[0].mxu0 %v1185
    %v1300 = vpop.f32.mrb[0].mxu0
    %v1301 = vadd.f32 %v1216, %v1300
    %v1302 = vpop.f32.mrb[0].mxu0
    %v1303 = vpop.f32.mrb[0].mxu0
    %v1304 = vadd.f32 %v1216, %v1303
    %v1305 = vpop.f32.mrb[0].mxu0
    %1306 = vmatprep.mubr.bf16.mxu0 0
    %1307 = vmatmul.mubr.bf16.gmra.mrb[0].mxu0 %v1186
    %v1308 = vpop.f32.mrb[0].mxu0
    %v1309 = vadd.f32 %v1216, %v1308
    %v1310 = vpop.f32.mrb[0].mxu0
    %v1311 = vpop.f32.mrb[0].mxu0
    %v1312 = vadd.f32 %v1216, %v1311
    %v1313 = vpop.f32.mrb[0].mxu0
    %1314 = vmatprep.mubr.bf16.mxu0 0
    %1315 = vmatmul.mubr.bf16.gmra.mrb[0].mxu0 %v1187
    %v1316 = vpop.f32.mrb[0].mxu0
    %v1317 = vadd.f32 %v1216, %v1316
    %v1318 = vpop.f32.mrb[0].mxu0
    %v1319 = vpop.f32.mrb[0].mxu0
    %v1320 = vadd.f32 %v1216, %v1319
    %v1321 = vpop.f32.mrb[0].mxu0
    %1322 = vmatprep.mubr.bf16.mxu0 0
    %1323 = vmatmul.mubr.bf16.gmra.mrb[0].mxu0 %v1188
    %v1324 = vpop.f32.mrb[0].mxu0
    %v1325 = vadd.f32 %v1216, %v1324
    %v1326 = vpop.f32.mrb[0].mxu0
    %v1327 = vpop.f32.mrb[0].mxu0
    %v1328 = vadd.f32 %v1216, %v1327
    %v1329 = vpop.f32.mrb[0].mxu0
    %1330 = vmatprep.mubr.bf16.mxu0 0
    %1331 = vmatmul.mubr.bf16.gmra.mrb[0].mxu0 %v1189
    %v1332 = vpop.f32.mrb[0].mxu0
    %v1333 = vadd.f32 %v1216, %v1332
    %v1334 = vpop.f32.mrb[0].mxu0
    %v1335 = vpop.f32.mrb[0].mxu0
    %v1336 = vadd.f32 %v1216, %v1335
    %v1337 = vpop.f32.mrb[0].mxu0
    %1338 = vmatprep.mubr.bf16.mxu0 0
    %1339 = vmatmul.mubr.bf16.gmra.mrb[0].mxu0 %v1190
    %v1340 = vpop.f32.mrb[0].mxu0
    %v1341 = vadd.f32 %v1216, %v1340
    %v1342 = vpop.f32.mrb[0].mxu0
    %v1343 = vpop.f32.mrb[0].mxu0
    %v1344 = vadd.f32 %v1216, %v1343
    %v1345 = vpop.f32.mrb[0].mxu0
    %1346 = vmatprep.mubr.bf16.mxu0 0
    %1347 = vmatmul.mubr.bf16.gmra.mrb[0].mxu0 %v1191
    %v1348 = vpop.f32.mrb[0].mxu0
    %v1349 = vadd.f32 %v1216, %v1348
    %v1350 = vpop.f32.mrb[0].mxu0
    %v1351 = vpop.f32.mrb[0].mxu0
    %v1352 = vadd.f32 %v1216, %v1351
    %v1353 = vpop.f32.mrb[0].mxu0
    %1354 = vmatprep.mubr.bf16.mxu0 0
    %1355 = vmatmul.mubr.bf16.gmra.mrb[0].mxu0 %v1192
    %v1356 = vpop.f32.mrb[0].mxu0
    %v1357 = vadd.f32 %v1216, %v1356
    %v1358 = vpop.f32.mrb[0].mxu0
    %v1359 = vpop.f32.mrb[0].mxu0
    %v1360 = vadd.f32 %v1216, %v1359
    %v1361 = vpop.f32.mrb[0].mxu0
    %1362 = vdwg.mxu0
    %v1363 = vmax.f32 %v1301, 0.0
    %v1364 = vmax.f32 %v1304, 0.0
    %v1365 = vmax.f32 %v1309, 0.0
    %v1366 = vmax.f32 %v1312, 0.0
    %v1367 = vmax.f32 %v1317, 0.0
    %v1368 = vmax.f32 %v1320, 0.0
    %v1369 = vmax.f32 %v1325, 0.0
    %v1370 = vmax.f32 %v1328, 0.0
    %v1371 = vmax.f32 %v1333, 0.0
    %v1372 = vmax.f32 %v1336, 0.0
    %v1373 = vmax.f32 %v1341, 0.0
    %v1374 = vmax.f32 %v1344, 0.0
    %v1375 = vmax.f32 %v1349, 0.0
    %v1376 = vmax.f32 %v1352, 0.0
    %v1377 = vmax.f32 %v1357, 0.0
    %v1378 = vmax.f32 %v1360, 0.0
    %v1379 = vpack.c.bf16 %v1364, %v1363
    %v1380 = vpack.c.bf16 %v1366, %v1365
    %v1381 = vpack.c.bf16 %v1368, %v1367
    %v1382 = vpack.c.bf16 %v1370, %v1369
    %v1383 = vpack.c.bf16 %v1372, %v1371
    %v1384 = vpack.c.bf16 %v1374, %v1373
    %v1385 = vpack.c.bf16 %v1376, %v1375
    %v1386 = vpack.c.bf16 %v1378, %v1377
    %s1387 = scalar_lea.vmem [#allocation2], 448
    %v1388 = vld [vmem:[%s1387] sm:$0xf]
    %v1389 = vld [vmem:[%s1387 + $0x4] sm:$0xf]
    %v1390 = vld [vmem:[%s1387 + $0x8] sm:$0xf]
    %v1391 = vld [vmem:[%s1387 + $0xc] sm:$0xf]
    %v1392 = vld [vmem:[%s1387 + $0x10] sm:$0xf]
    %v1393 = vld [vmem:[%s1387 + $0x14] sm:$0xf]
    %v1394 = vld [vmem:[%s1387 + $0x18] sm:$0xf]
    %v1395 = vld [vmem:[%s1387 + $0x1c] sm:$0xf]
    %v1396 = vld [vmem:[%s1387 + $0x20] sm:$0xf]
    %v1397 = vld [vmem:[%s1387 + $0x24] sm:$0xf]
    %v1398 = vld [vmem:[%s1387 + $0x28] sm:$0xf]
    %v1399 = vld [vmem:[%s1387 + $0x2c] sm:$0xf]
    %v1400 = vld [vmem:[%s1387 + $0x30] sm:$0xf]
    %v1401 = vld [vmem:[%s1387 + $0x34] sm:$0xf]
    %v1402 = vld [vmem:[%s1387 + $0x38] sm:$0xf]
    %v1403 = vld [vmem:[%s1387 + $0x3c] sm:$0xf]
    %s1404 = scalar_lea.vmem %s2, 7
    %v1405 = vld [vmem:[%s1404] sm:$0x1]
    %v1407 = vlaneseq
    %v1408 = vshrl.u32 %v1407, 7
    %v1409 = vsub.s32 0, %v1408
    %v1410 = vrot.slane %v1405, %v1409
    %v1428 = vunpack.c.l.b16 %v1388
    %v1429 = vunpack.c.l.b16 %v1389
    %v1430 = vunpack.c.l.b16 %v1390
    %v1431 = vunpack.c.l.b16 %v1391
    %v1432 = vunpack.c.l.b16 %v1392
    %v1433 = vunpack.c.l.b16 %v1393
    %v1434 = vunpack.c.l.b16 %v1394
    %v1435 = vunpack.c.l.b16 %v1395
    %v1436 = vunpack.c.l.b16 %v1396
    %v1437 = vunpack.c.l.b16 %v1397
    %v1438 = vunpack.c.l.b16 %v1398
    %v1439 = vunpack.c.l.b16 %v1399
    %v1440 = vunpack.c.l.b16 %v1400
    %v1441 = vunpack.c.l.b16 %v1401
    %v1442 = vunpack.c.l.b16 %v1402
    %v1443 = vunpack.c.l.b16 %v1403
    %v1444 = vpack.c.b16 %v1429, %v1428
    %v1445 = vpack.c.b16 %v1431, %v1430
    %v1446 = vpack.c.b16 %v1433, %v1432
    %v1447 = vpack.c.b16 %v1435, %v1434
    %v1448 = vpack.c.b16 %v1437, %v1436
    %v1449 = vpack.c.b16 %v1439, %v1438
    %v1450 = vpack.c.b16 %v1441, %v1440
    %v1451 = vpack.c.b16 %v1443, %v1442
    %1460 = vmatprep.subr.bf16.mxu0 0
    %1461 = vmatpush1.bf16.msra.mxu0 %v1444
    %1462 = vmatprep.subr.bf16.mxu0 0
    %1463 = vmatpush1.bf16.msra.mxu0 %v1445
    %1464 = vmatprep.subr.bf16.mxu0 0
    %1465 = vmatpush1.bf16.msra.mxu0 %v1446
    %1466 = vmatprep.subr.bf16.mxu0 0
    %1467 = vmatpush1.bf16.msra.mxu0 %v1447
    %1468 = vmatprep.subr.bf16.mxu0 0
    %1469 = vmatpush1.bf16.msra.mxu0 %v1448
    %1470 = vmatprep.subr.bf16.mxu0 0
    %1471 = vmatpush1.bf16.msra.mxu0 %v1449
    %1472 = vmatprep.subr.bf16.mxu0 0
    %1473 = vmatpush1.bf16.msra.mxu0 %v1450
    %1474 = vmatprep.subr.bf16.mxu0 0
    %1475 = vmatpush1.bf16.msra.mxu0 %v1451
    %1476 = vmatprep.subr.bf16.mxu0 0
    %1477 = vmatpush1.bf16.msra.mxu0 0
    %1478 = vmatprep.subr.bf16.mxu0 0
    %1479 = vmatpush1.bf16.msra.mxu0 0
    %1480 = vmatprep.subr.bf16.mxu0 0
    %1481 = vmatpush1.bf16.msra.mxu0 0
    %1482 = vmatprep.subr.bf16.mxu0 0
    %1483 = vmatpush1.bf16.msra.mxu0 0
    %1484 = vmatprep.subr.bf16.mxu0 0
    %1485 = vmatpush1.bf16.msra.mxu0 0
    %1486 = vmatprep.subr.bf16.mxu0 0
    %1487 = vmatpush1.bf16.msra.mxu0 0
    %1488 = vmatprep.subr.bf16.mxu0 0
    %1489 = vmatpush1.bf16.msra.mxu0 0
    %1490 = vmatprep.subr.bf16.mxu0 0
    %1491 = vmatpush1.bf16.msra.mxu0 0
    %1492 = vmatprep.mubr.bf16.mxu0 0
    %1493 = vmatmul.mubr.bf16.gmra.mrb[0].mxu0 %v1379
    %v1494 = vpop.f32.mrb[0].mxu0
    %v1495 = vadd.f32 %v1410, %v1494
    %v1496 = vpop.f32.mrb[0].mxu0
    %v1497 = vpop.f32.mrb[0].mxu0
    %v1498 = vadd.f32 %v1410, %v1497
    %v1499 = vpop.f32.mrb[0].mxu0
    %1500 = vmatprep.mubr.bf16.mxu0 0
    %1501 = vmatmul.mubr.bf16.gmra.mrb[0].mxu0 %v1380
    %v1502 = vpop.f32.mrb[0].mxu0
    %v1503 = vadd.f32 %v1410, %v1502
    %v1504 = vpop.f32.mrb[0].mxu0
    %v1505 = vpop.f32.mrb[0].mxu0
    %v1506 = vadd.f32 %v1410, %v1505
    %v1507 = vpop.f32.mrb[0].mxu0
    %1508 = vmatprep.mubr.bf16.mxu0 0
    %1509 = vmatmul.mubr.bf16.gmra.mrb[0].mxu0 %v1381
    %v1510 = vpop.f32.mrb[0].mxu0
    %v1511 = vadd.f32 %v1410, %v1510
    %v1512 = vpop.f32.mrb[0].mxu0
    %v1513 = vpop.f32.mrb[0].mxu0
    %v1514 = vadd.f32 %v1410, %v1513
    %v1515 = vpop.f32.mrb[0].mxu0
    %1516 = vmatprep.mubr.bf16.mxu0 0
    %1517 = vmatmul.mubr.bf16.gmra.mrb[0].mxu0 %v1382
    %v1518 = vpop.f32.mrb[0].mxu0
    %v1519 = vadd.f32 %v1410, %v1518
    %v1520 = vpop.f32.mrb[0].mxu0
    %v1521 = vpop.f32.mrb[0].mxu0
    %v1522 = vadd.f32 %v1410, %v1521
    %v1523 = vpop.f32.mrb[0].mxu0
    %1524 = vmatprep.mubr.bf16.mxu0 0
    %1525 = vmatmul.mubr.bf16.gmra.mrb[0].mxu0 %v1383
    %v1526 = vpop.f32.mrb[0].mxu0
    %v1527 = vadd.f32 %v1410, %v1526
    %v1528 = vpop.f32.mrb[0].mxu0
    %v1529 = vpop.f32.mrb[0].mxu0
    %v1530 = vadd.f32 %v1410, %v1529
    %v1531 = vpop.f32.mrb[0].mxu0
    %1532 = vmatprep.mubr.bf16.mxu0 0
    %1533 = vmatmul.mubr.bf16.gmra.mrb[0].mxu0 %v1384
    %v1534 = vpop.f32.mrb[0].mxu0
    %v1535 = vadd.f32 %v1410, %v1534
    %v1536 = vpop.f32.mrb[0].mxu0
    %v1537 = vpop.f32.mrb[0].mxu0
    %v1538 = vadd.f32 %v1410, %v1537
    %v1539 = vpop.f32.mrb[0].mxu0
    %1540 = vmatprep.mubr.bf16.mxu0 0
    %1541 = vmatmul.mubr.bf16.gmra.mrb[0].mxu0 %v1385
    %v1542 = vpop.f32.mrb[0].mxu0
    %v1543 = vadd.f32 %v1410, %v1542
    %v1544 = vpop.f32.mrb[0].mxu0
    %v1545 = vpop.f32.mrb[0].mxu0
    %v1546 = vadd.f32 %v1410, %v1545
    %v1547 = vpop.f32.mrb[0].mxu0
    %1548 = vmatprep.mubr.bf16.mxu0 0
    %1549 = vmatmul.mubr.bf16.gmra.mrb[0].mxu0 %v1386
    %v1550 = vpop.f32.mrb[0].mxu0
    %v1551 = vadd.f32 %v1410, %v1550
    %v1552 = vpop.f32.mrb[0].mxu0
    %v1553 = vpop.f32.mrb[0].mxu0
    %v1554 = vadd.f32 %v1410, %v1553
    %v1555 = vpop.f32.mrb[0].mxu0
    %1556 = vdwg.mxu0
    %v1557 = vmax.f32 %v1495, 0.0
    %v1558 = vmax.f32 %v1498, 0.0
    %v1559 = vmax.f32 %v1503, 0.0
    %v1560 = vmax.f32 %v1506, 0.0
    %v1561 = vmax.f32 %v1511, 0.0
    %v1562 = vmax.f32 %v1514, 0.0
    %v1563 = vmax.f32 %v1519, 0.0
    %v1564 = vmax.f32 %v1522, 0.0
    %v1565 = vmax.f32 %v1527, 0.0
    %v1566 = vmax.f32 %v1530, 0.0
    %v1567 = vmax.f32 %v1535, 0.0
    %v1568 = vmax.f32 %v1538, 0.0
    %v1569 = vmax.f32 %v1543, 0.0
    %v1570 = vmax.f32 %v1546, 0.0
    %v1571 = vmax.f32 %v1551, 0.0
    %v1572 = vmax.f32 %v1554, 0.0
    %v1573 = vpack.c.bf16 %v1558, %v1557
    %v1574 = vpack.c.bf16 %v1560, %v1559
    %v1575 = vpack.c.bf16 %v1562, %v1561
    %v1576 = vpack.c.bf16 %v1564, %v1563
    %v1577 = vpack.c.bf16 %v1566, %v1565
    %v1578 = vpack.c.bf16 %v1568, %v1567
    %v1579 = vpack.c.bf16 %v1570, %v1569
    %v1580 = vpack.c.bf16 %v1572, %v1571
    %s1581 = scalar_lea.vmem [#allocation2], 512
    %v1582 = vld [vmem:[%s1581] sm:$0xf]
    %v1583 = vld [vmem:[%s1581 + $0x4] sm:$0xf]
    %v1584 = vld [vmem:[%s1581 + $0x8] sm:$0xf]
    %v1585 = vld [vmem:[%s1581 + $0xc] sm:$0xf]
    %v1586 = vld [vmem:[%s1581 + $0x10] sm:$0xf]
    %v1587 = vld [vmem:[%s1581 + $0x14] sm:$0xf]
    %v1588 = vld [vmem:[%s1581 + $0x18] sm:$0xf]
    %v1589 = vld [vmem:[%s1581 + $0x1c] sm:$0xf]
    %v1590 = vld [vmem:[%s1581 + $0x20] sm:$0xf]
    %v1591 = vld [vmem:[%s1581 + $0x24] sm:$0xf]
    %v1592 = vld [vmem:[%s1581 + $0x28] sm:$0xf]
    %v1593 = vld [vmem:[%s1581 + $0x2c] sm:$0xf]
    %v1594 = vld [vmem:[%s1581 + $0x30] sm:$0xf]
    %v1595 = vld [vmem:[%s1581 + $0x34] sm:$0xf]
    %v1596 = vld [vmem:[%s1581 + $0x38] sm:$0xf]
    %v1597 = vld [vmem:[%s1581 + $0x3c] sm:$0xf]
    %s1598 = scalar_lea.vmem %s2, 8
    %v1599 = vld [vmem:[%s1598] sm:$0x1]
    %v1601 = vlaneseq
    %v1602 = vshrl.u32 %v1601, 7
    %v1603 = vsub.s32 0, %v1602
    %v1604 = vrot.slane %v1599, %v1603
    %v1622 = vunpack.c.l.b16 %v1582
    %v1623 = vunpack.c.l.b16 %v1583
    %v1624 = vunpack.c.l.b16 %v1584
    %v1625 = vunpack.c.l.b16 %v1585
    %v1626 = vunpack.c.l.b16 %v1586
    %v1627 = vunpack.c.l.b16 %v1587
    %v1628 = vunpack.c.l.b16 %v1588
    %v1629 = vunpack.c.l.b16 %v1589
    %v1630 = vunpack.c.l.b16 %v1590
    %v1631 = vunpack.c.l.b16 %v1591
    %v1632 = vunpack.c.l.b16 %v1592
    %v1633 = vunpack.c.l.b16 %v1593
    %v1634 = vunpack.c.l.b16 %v1594
    %v1635 = vunpack.c.l.b16 %v1595
    %v1636 = vunpack.c.l.b16 %v1596
    %v1637 = vunpack.c.l.b16 %v1597
    %v1638 = vpack.c.b16 %v1623, %v1622
    %v1639 = vpack.c.b16 %v1625, %v1624
    %v1640 = vpack.c.b16 %v1627, %v1626
    %v1641 = vpack.c.b16 %v1629, %v1628
    %v1642 = vpack.c.b16 %v1631, %v1630
    %v1643 = vpack.c.b16 %v1633, %v1632
    %v1644 = vpack.c.b16 %v1635, %v1634
    %v1645 = vpack.c.b16 %v1637, %v1636
    %1654 = vmatprep.subr.bf16.mxu0 0
    %1655 = vmatpush1.bf16.msra.mxu0 %v1638
    %1656 = vmatprep.subr.bf16.mxu0 0
    %1657 = vmatpush1.bf16.msra.mxu0 %v1639
    %1658 = vmatprep.subr.bf16.mxu0 0
    %1659 = vmatpush1.bf16.msra.mxu0 %v1640
    %1660 = vmatprep.subr.bf16.mxu0 0
    %1661 = vmatpush1.bf16.msra.mxu0 %v1641
    %1662 = vmatprep.subr.bf16.mxu0 0
    %1663 = vmatpush1.bf16.msra.mxu0 %v1642
    %1664 = vmatprep.subr.bf16.mxu0 0
    %1665 = vmatpush1.bf16.msra.mxu0 %v1643
    %1666 = vmatprep.subr.bf16.mxu0 0
    %1667 = vmatpush1.bf16.msra.mxu0 %v1644
    %1668 = vmatprep.subr.bf16.mxu0 0
    %1669 = vmatpush1.bf16.msra.mxu0 %v1645
    %1670 = vmatprep.subr.bf16.mxu0 0
    %1671 = vmatpush1.bf16.msra.mxu0 0
    %1672 = vmatprep.subr.bf16.mxu0 0
    %1673 = vmatpush1.bf16.msra.mxu0 0
    %1674 = vmatprep.subr.bf16.mxu0 0
    %1675 = vmatpush1.bf16.msra.mxu0 0
    %1676 = vmatprep.subr.bf16.mxu0 0
    %1677 = vmatpush1.bf16.msra.mxu0 0
    %1678 = vmatprep.subr.bf16.mxu0 0
    %1679 = vmatpush1.bf16.msra.mxu0 0
    %1680 = vmatprep.subr.bf16.mxu0 0
    %1681 = vmatpush1.bf16.msra.mxu0 0
    %1682 = vmatprep.subr.bf16.mxu0 0
    %1683 = vmatpush1.bf16.msra.mxu0 0
    %1684 = vmatprep.subr.bf16.mxu0 0
    %1685 = vmatpush1.bf16.msra.mxu0 0
    %1686 = vmatprep.mubr.bf16.mxu0 0
    %1687 = vmatmul.mubr.bf16.gmra.mrb[0].mxu0 %v1573
    %v1688 = vpop.f32.mrb[0].mxu0
    %v1689 = vadd.f32 %v1604, %v1688
    %v1690 = vpop.f32.mrb[0].mxu0
    %v1691 = vpop.f32.mrb[0].mxu0
    %v1692 = vadd.f32 %v1604, %v1691
    %v1693 = vpop.f32.mrb[0].mxu0
    %1694 = vmatprep.mubr.bf16.mxu0 0
    %1695 = vmatmul.mubr.bf16.gmra.mrb[0].mxu0 %v1574
    %v1696 = vpop.f32.mrb[0].mxu0
    %v1697 = vadd.f32 %v1604, %v1696
    %v1698 = vpop.f32.mrb[0].mxu0
    %v1699 = vpop.f32.mrb[0].mxu0
    %v1700 = vadd.f32 %v1604, %v1699
    %v1701 = vpop.f32.mrb[0].mxu0
    %1702 = vmatprep.mubr.bf16.mxu0 0
    %1703 = vmatmul.mubr.bf16.gmra.mrb[0].mxu0 %v1575
    %v1704 = vpop.f32.mrb[0].mxu0
    %v1705 = vadd.f32 %v1604, %v1704
    %v1706 = vpop.f32.mrb[0].mxu0
    %v1707 = vpop.f32.mrb[0].mxu0
    %v1708 = vadd.f32 %v1604, %v1707
    %v1709 = vpop.f32.mrb[0].mxu0
    %1710 = vmatprep.mubr.bf16.mxu0 0
    %1711 = vmatmul.mubr.bf16.gmra.mrb[0].mxu0 %v1576
    %v1712 = vpop.f32.mrb[0].mxu0
    %v1713 = vadd.f32 %v1604, %v1712
    %v1714 = vpop.f32.mrb[0].mxu0
    %v1715 = vpop.f32.mrb[0].mxu0
    %v1716 = vadd.f32 %v1604, %v1715
    %v1717 = vpop.f32.mrb[0].mxu0
    %1718 = vmatprep.mubr.bf16.mxu0 0
    %1719 = vmatmul.mubr.bf16.gmra.mrb[0].mxu0 %v1577
    %v1720 = vpop.f32.mrb[0].mxu0
    %v1721 = vadd.f32 %v1604, %v1720
    %v1722 = vpop.f32.mrb[0].mxu0
    %v1723 = vpop.f32.mrb[0].mxu0
    %v1724 = vadd.f32 %v1604, %v1723
    %v1725 = vpop.f32.mrb[0].mxu0
    %1726 = vmatprep.mubr.bf16.mxu0 0
    %1727 = vmatmul.mubr.bf16.gmra.mrb[0].mxu0 %v1578
    %v1728 = vpop.f32.mrb[0].mxu0
    %v1729 = vadd.f32 %v1604, %v1728
    %v1730 = vpop.f32.mrb[0].mxu0
    %v1731 = vpop.f32.mrb[0].mxu0
    %v1732 = vadd.f32 %v1604, %v1731
    %v1733 = vpop.f32.mrb[0].mxu0
    %1734 = vmatprep.mubr.bf16.mxu0 0
    %1735 = vmatmul.mubr.bf16.gmra.mrb[0].mxu0 %v1579
    %v1736 = vpop.f32.mrb[0].mxu0
    %v1737 = vadd.f32 %v1604, %v1736
    %v1738 = vpop.f32.mrb[0].mxu0
    %v1739 = vpop.f32.mrb[0].mxu0
    %v1740 = vadd.f32 %v1604, %v1739
    %v1741 = vpop.f32.mrb[0].mxu0
    %1742 = vmatprep.mubr.bf16.mxu0 0
    %1743 = vmatmul.mubr.bf16.gmra.mrb[0].mxu0 %v1580
    %v1744 = vpop.f32.mrb[0].mxu0
    %v1745 = vadd.f32 %v1604, %v1744
    %v1746 = vpop.f32.mrb[0].mxu0
    %v1747 = vpop.f32.mrb[0].mxu0
    %v1748 = vadd.f32 %v1604, %v1747
    %v1749 = vpop.f32.mrb[0].mxu0
    %1750 = vdwg.mxu0
    %v1751 = vsub.f32 0.0, %v1689
    %v1752 = vsub.f32 0.0, %v1692
    %v1753 = vsub.f32 0.0, %v1697
    %v1754 = vsub.f32 0.0, %v1700
    %v1755 = vsub.f32 0.0, %v1705
    %v1756 = vsub.f32 0.0, %v1708
    %v1757 = vsub.f32 0.0, %v1713
    %v1758 = vsub.f32 0.0, %v1716
    %v1759 = vsub.f32 0.0, %v1721
    %v1760 = vsub.f32 0.0, %v1724
    %v1761 = vsub.f32 0.0, %v1729
    %v1762 = vsub.f32 0.0, %v1732
    %v1763 = vsub.f32 0.0, %v1737
    %v1764 = vsub.f32 0.0, %v1740
    %v1765 = vsub.f32 0.0, %v1745
    %v1766 = vsub.f32 0.0, %v1748
    %v1767 = vmul.f32 %v1751, 1.442695
    %v1768 = vpow.pop %v1767
    %v1769 = vmul.f32 %v1752, 1.442695
    %v1770 = vpow.pop %v1769
    %v1771 = vmul.f32 %v1753, 1.442695
    %v1772 = vpow.pop %v1771
    %v1773 = vmul.f32 %v1754, 1.442695
    %v1774 = vpow.pop %v1773
    %v1775 = vmul.f32 %v1755, 1.442695
    %v1776 = vpow.pop %v1775
    %v1777 = vmul.f32 %v1756, 1.442695
    %v1778 = vpow.pop %v1777
    %v1779 = vmul.f32 %v1757, 1.442695
    %v1780 = vpow.pop %v1779
    %v1781 = vmul.f32 %v1758, 1.442695
    %v1782 = vpow.pop %v1781
    %v1783 = vmul.f32 %v1759, 1.442695
    %v1784 = vpow.pop %v1783
    %v1785 = vmul.f32 %v1760, 1.442695
    %v1786 = vpow.pop %v1785
    %v1787 = vmul.f32 %v1761, 1.442695
    %v1788 = vpow.pop %v1787
    %v1789 = vmul.f32 %v1762, 1.442695
    %v1790 = vpow.pop %v1789
    %v1791 = vmul.f32 %v1763, 1.442695
    %v1792 = vpow.pop %v1791
    %v1793 = vmul.f32 %v1764, 1.442695
    %v1794 = vpow.pop %v1793
    %v1795 = vmul.f32 %v1765, 1.442695
    %v1796 = vpow.pop %v1795
    %v1797 = vmul.f32 %v1766, 1.442695
    %v1798 = vpow.pop %v1797
    %v1799 = vadd.f32 %v1768, 1.0
    %v1800 = vadd.f32 %v1770, 1.0
    %v1801 = vadd.f32 %v1772, 1.0
    %v1802 = vadd.f32 %v1774, 1.0
    %v1803 = vadd.f32 %v1776, 1.0
    %v1804 = vadd.f32 %v1778, 1.0
    %v1805 = vadd.f32 %v1780, 1.0
    %v1806 = vadd.f32 %v1782, 1.0
    %v1807 = vadd.f32 %v1784, 1.0
    %v1808 = vadd.f32 %v1786, 1.0
    %v1809 = vadd.f32 %v1788, 1.0
    %v1810 = vadd.f32 %v1790, 1.0
    %v1811 = vadd.f32 %v1792, 1.0
    %v1812 = vadd.f32 %v1794, 1.0
    %v1813 = vadd.f32 %v1796, 1.0
    %v1814 = vadd.f32 %v1798, 1.0
    %v1815 = vrcp.pop %v1799
    %v1816 = vrcp.pop %v1800
    %v1817 = vrcp.pop %v1801
    %v1818 = vrcp.pop %v1802
    %v1819 = vrcp.pop %v1803
    %v1820 = vrcp.pop %v1804
    %v1821 = vrcp.pop %v1805
    %v1822 = vrcp.pop %v1806
    %v1823 = vrcp.pop %v1807
    %v1824 = vrcp.pop %v1808
    %v1825 = vrcp.pop %v1809
    %v1826 = vrcp.pop %v1810
    %v1827 = vrcp.pop %v1811
    %v1828 = vrcp.pop %v1812
    %v1829 = vrcp.pop %v1813
    %v1830 = vrcp.pop %v1814
    %v1831 = vlaneseq
    %v1832 = vand.u32 %v1831, 127
    %vm1833 = vcmp.eq.s32.totalorder %v1832, 127
    %v1834 = vsel %vm1833, %v1815, %v929
    %v1835 = vsel %vm1833, %v1816, %v932
    %v1836 = vsel %vm1833, %v1817, %v937
    %v1837 = vsel %vm1833, %v1818, %v940
    %v1838 = vsel %vm1833, %v1819, %v945
    %v1839 = vsel %vm1833, %v1820, %v948
    %v1840 = vsel %vm1833, %v1821, %v953
    %v1841 = vsel %vm1833, %v1822, %v956
    %v1842 = vsel %vm1833, %v1823, %v961
    %v1843 = vsel %vm1833, %v1824, %v964
    %v1844 = vsel %vm1833, %v1825, %v969
    %v1845 = vsel %vm1833, %v1826, %v972
    %v1846 = vsel %vm1833, %v1827, %v977
    %v1847 = vsel %vm1833, %v1828, %v980
    %v1848 = vsel %vm1833, %v1829, %v985
    %v1849 = vsel %vm1833, %v1830, %v988
    %1850 = vst [vmem:[#allocation5] sm:$0xff] %v1834
    %1851 = vst [vmem:[#allocation5 + $0x8] sm:$0xff] %v1835
    %1852 = vst [vmem:[#allocation5 + $0x10] sm:$0xff] %v1836
    %1853 = vst [vmem:[#allocation5 + $0x18] sm:$0xff] %v1837
    %1854 = vst [vmem:[#allocation5 + $0x20] sm:$0xff] %v1838
    %1855 = vst [vmem:[#allocation5 + $0x28] sm:$0xff] %v1839
    %1856 = vst [vmem:[#allocation5 + $0x30] sm:$0xff] %v1840
    %1857 = vst [vmem:[#allocation5 + $0x38] sm:$0xff] %v1841
    %1858 = vst [vmem:[#allocation5 + $0x40] sm:$0xff] %v1842
    %1859 = vst [vmem:[#allocation5 + $0x48] sm:$0xff] %v1843
    %1860 = vst [vmem:[#allocation5 + $0x50] sm:$0xff] %v1844
    %1861 = vst [vmem:[#allocation5 + $0x58] sm:$0xff] %v1845
    %1862 = vst [vmem:[#allocation5 + $0x60] sm:$0xff] %v1846
    %1863 = vst [vmem:[#allocation5 + $0x68] sm:$0xff] %v1847
    %1864 = vst [vmem:[#allocation5 + $0x70] sm:$0xff] %v1848
    %1865 = vst [vmem:[#allocation5 + $0x78] sm:$0xff] %v1849
    // Predicated region
    $region18: #{tpu_custom_call.1} parent=1 // pred_check
      _
    $region19: #{tpu_custom_call.1} parent=1 // pred_check_branch
      %1867 = sbr.rel (0) target = $region21
    $region20: #{tpu_custom_call.1} parent=1 // pred_region
      %s1869 = ssub.s32 2048, 2048
      %1870 = vsyncadd [#allocation4], %s1869
      %s1871 = sshll.u32 [#allocation5], 4
      %s1872 = int_to_ptr.vmem [resolvable:$true] %s1871
      %1877 = dma.vmem_to_hbm [thread:$0]  %s1872, 2048, %s3, [#allocation4], 128, 128, 8
    $region21: #{tpu_custom_call.1} parent=1 // pred_fallthru
      _
    // Predicated region
    $region22: #{tpu_custom_call.1} parent=1 // pred_check
      _
    $region23: #{tpu_custom_call.1} parent=1 // pred_check_branch
      %1879 = sbr.rel (0) target = $region25
    $region24: #{tpu_custom_call.1} parent=1 // pred_region
      %1880 = dma.done [#allocation4], 2048
    $region25: #{tpu_custom_call.1} parent=1 // pred_fallthru
      _
    %1881 = vsyncpa [#allocation3], 1
    %1882 = vsyncpa [#allocation4], 1

</llo_original>
